<compile_context>
chip_gen: v7x
topology: tpu7x:2x2x1
jax: 0.10.0
libtpu: 0.0.40
codegen_flags: <defaults>
</compile_context>

<pallas_src>
import functools
import math

import jax
import jax.numpy as jnp
from jax.experimental import pallas as pl
from jax.experimental.pallas import tpu as pltpu


def _mha_rope_kernel(x_ref, w_ref, wo_ref, cq_ref, dq_ref, ck_ref, dk_ref,
                     o_ref, oscr_ref, *, seq_len, head_dim, heads_per_tile,
                     batch_tile, num_head_tiles):
    S, hd, HT, Bt = seq_len, head_dim, heads_per_tile, batch_tile
    ht = pl.program_id(1)

    x = x_ref[...]                     # (Bt*S, H)      bf16
    w = w_ref[0]                       # (H, 3*HT*hd)   bf16 fused [q|k|v] cols

    # One fused projection matmul per grid step: M=Bt*S, N=3*HT*hd, f32 acc.
    qkv = jnp.dot(x, w, preferred_element_type=jnp.float32)

    cq = cq_ref[...]                   # (Bt*S, hd) f32, q table * 1/sqrt(hd)
    dq = dq_ref[...]
    ck = ck_ref[...]
    dk = dk_ref[...]

    kcol = HT * hd
    vcol = 2 * HT * hd
    for j in range(HT):                # static unroll over heads in the tile
        q = qkv[:, j * hd:(j + 1) * hd]                          # (Bt*S, hd)
        k = qkv[:, kcol + j * hd:kcol + (j + 1) * hd]
        v = qkv[:, vcol + j * hd:vcol + (j + 1) * hd]

        # rotate-half RoPE: one XLU roll + two mul/adds per tensor (f32);
        # the 1/sqrt(hd) attention scale is folded into cq/dq.
        q = q * cq + pltpu.roll(q, shift=hd // 2, axis=1) * dq
        k = k * ck + pltpu.roll(k, shift=hd // 2, axis=1) * dk

        qb = q.astype(jnp.bfloat16)
        kb = k.astype(jnp.bfloat16)
        vb = v.astype(jnp.bfloat16)

        for b in range(Bt):            # static unroll over batch rows in tile
            r0 = b * S
            # scores: contract last dims directly (no explicit transpose)
            s = jax.lax.dot_general(
                qb[r0:r0 + S], kb[r0:r0 + S],
                dimension_numbers=(((1,), (1,)), ((), ())),
                preferred_element_type=jnp.float32)              # (S, S)
            m = jnp.max(s, axis=-1, keepdims=True)
            e = jnp.exp(s - m)
            denom = jnp.sum(e, axis=-1, keepdims=True)
            o = jnp.dot(e.astype(jnp.bfloat16), vb[r0:r0 + S],
                        preferred_element_type=jnp.float32)      # (S, hd)
            # exact reciprocal on the tiny (S, 1) denominator, applied to the
            # (S, hd) PV result (review: approx recip costs accuracy).
            o = o * pl.reciprocal(denom)
            # write this head's output once (bf16) into the persistent scratch
            oscr_ref[ht, r0:r0 + S, j * hd:(j + 1) * hd] = o.astype(
                oscr_ref.dtype)

    # Deferred output projection: once per batch tile at the last head-tile,
    # K chunked over head-tiles with register accumulation (no per-step RMW).
    @pl.when(ht == num_head_tiles - 1)
    def _project():
        acc = None
        for t in range(num_head_tiles):
            part = jnp.dot(oscr_ref[t],
                           wo_ref[t * HT * hd:(t + 1) * HT * hd, :],
                           preferred_element_type=jnp.float32)   # (Bt*S, H)
            acc = part if acc is None else acc + part
        o_ref[...] = acc.astype(o_ref.dtype)


def _largest_divisor_at_most(n, cap):
    best = 1
    for c in range(1, n + 1):
        if n % c == 0 and c <= cap:
            best = c
    return best


def prepare_multi_type_attention_weights(w_qkv, w_out, frequency_cis, *,
                                         num_heads, head_dim,
                                         heads_per_tile=None):
    """One-time (weight-load-time) preparation of the kernel operands.

    w_qkv: (3H, H) fused QKV nn.Linear weight (no bias).
    w_out: (H, H) output projection nn.Linear weight (no bias).
    frequency_cis: (S, head_dim//2, 2, 2) RoPE rotation matrices.
    """
    H = num_heads * head_dim
    hd = head_dim
    assert w_qkv.shape == (3 * H, H) and w_out.shape == (H, H)
    assert hd % 2 == 0
    if heads_per_tile is None:
        # aim for ~256 MXU columns per q/k/v sub-block on v6e/v7x
        heads_per_tile = _largest_divisor_at_most(num_heads,
                                                  max(1, 256 // hd))
    HT = heads_per_tile
    assert num_heads % HT == 0
    nHT = num_heads // HT

    wt = w_qkv.T.astype(jnp.float32)                 # (H, 3H): qkv = x @ w.T
    wq = wt[:, 0 * H:1 * H].reshape(H, num_heads, hd)
    wk = wt[:, 1 * H:2 * H].reshape(H, num_heads, hd)
    wv = wt[:, 2 * H:3 * H].reshape(H, num_heads, hd)

    # de-interleave RoPE pairs (component 0 -> lanes [0, hd/2), component 1 ->
    # lanes [hd/2, hd)) so RoPE becomes a single rotate-by-hd/2 in the kernel.
    perm = jnp.concatenate([jnp.arange(0, hd, 2), jnp.arange(1, hd, 2)])
    wq = wq[:, :, perm]
    wk = wk[:, :, perm]

    def per_tile(w):                        # (H, nH, hd) -> (nHT, H, HT*hd)
        return jnp.transpose(w.reshape(H, nHT, HT, hd),
                             (1, 0, 2, 3)).reshape(nHT, H, HT * hd)

    # fused per-head-tile weight, columns = [q heads | k heads | v heads]
    w_fused = jnp.concatenate([per_tile(wq), per_tile(wk), per_tile(wv)],
                              axis=-1).astype(jnp.bfloat16)  # (nHT,H,3*HT*hd)
    wo_t = w_out.T.astype(jnp.bfloat16)                      # (H, H)

    # rotate-half RoPE tables (de-interleaved layout, f32, shared by heads);
    # the 1/sqrt(hd) attention scale is folded into the f32 q-side tables so
    # it is not quantised into bf16 weights.
    fc = frequency_cis.astype(jnp.float32)            # (S, hd//2, 2, 2)
    c = jnp.concatenate([fc[:, :, 0, 0], fc[:, :, 1, 1]], axis=-1)  # (S, hd)
    d = jnp.concatenate([fc[:, :, 0, 1], fc[:, :, 1, 0]], axis=-1)  # (S, hd)
    scale = 1.0 / math.sqrt(hd)
    return dict(w_fused=w_fused, wo_t=wo_t,
                cq=c * scale, dq=d * scale, ck=c, dk=d,
                num_heads=num_heads, head_dim=hd, heads_per_tile=HT)


def multi_type_attention_block(x, prepared, *, batch_tile=None,
                               out_dtype=jnp.bfloat16):
    """x: (B, S, H) -> (B, S, H); sdpa path, no mask, no kv-cache."""
    B, S, H = x.shape
    hd = prepared['head_dim']
    HT = prepared['heads_per_tile']
    num_heads = prepared['num_heads']
    nHT = num_heads // HT
    assert H == num_heads * hd
    assert prepared['cq'].shape[0] == S, 'frequency_cis seq length mismatch'

    if batch_tile is None:
        # largest batch-row count whose bf16 x block stays under ~2 MiB
        batch_tile = _largest_divisor_at_most(
            B, max(1, (2 * 1024 * 1024) // max(1, S * H * 2)))
    Bt = batch_tile
    assert B % Bt == 0
    if (Bt * S) % 8 != 0 and Bt * S != B * S:
        Bt = B                       # keep the block sublane-tileable
    M = Bt * S
    nBT = B // Bt

    x2 = x.reshape(B * S, H).astype(jnp.bfloat16)
    # RoPE tables tiled over the Bt batch rows of one block (tiny, per call)
    cq = jnp.tile(prepared['cq'], (Bt, 1))
    dq = jnp.tile(prepared['dq'], (Bt, 1))
    ck = jnp.tile(prepared['ck'], (Bt, 1))
    dk = jnp.tile(prepared['dk'], (Bt, 1))

    n3 = 3 * HT * hd
    out_bytes = jnp.dtype(out_dtype).itemsize
    # VMEM budget from the actual block set (double-buffered blocks +
    # persistent scratch), 2x headroom, clamped to [32, 64] MiB.
    est = (2 * M * H * 2 + 2 * H * n3 * 2 + 2 * H * H * 2
           + 2 * 4 * M * hd * 4 + 2 * M * H * out_bytes + M * H * 2)
    vmem_limit = int(min(64 * 1024 * 1024, max(32 * 1024 * 1024, 2 * est)))

    kernel = functools.partial(
        _mha_rope_kernel, seq_len=S, head_dim=hd, heads_per_tile=HT,
        batch_tile=Bt, num_head_tiles=nHT)

    out2 = pl.pallas_call(
        kernel,
        out_shape=jax.ShapeDtypeStruct((B * S, H), out_dtype),
        grid_spec=pltpu.PrefetchScalarGridSpec(
            num_scalar_prefetch=0,
            grid=(nBT, nHT),                    # head-tile axis = assembly axis
            in_specs=[
                pl.BlockSpec((M, H), lambda b, h: (b, 0)),          # x rows
                pl.BlockSpec((1, H, n3), lambda b, h: (h, 0, 0)),   # fused qkv
                pl.BlockSpec((H, H), lambda b, h: (0, 0)),          # W_out^T
                pl.BlockSpec((M, hd), lambda b, h: (0, 0)),         # RoPE cq
                pl.BlockSpec((M, hd), lambda b, h: (0, 0)),         # RoPE dq
                pl.BlockSpec((M, hd), lambda b, h: (0, 0)),         # RoPE ck
                pl.BlockSpec((M, hd), lambda b, h: (0, 0)),         # RoPE dk
            ],
            out_specs=pl.BlockSpec((M, H), lambda b, h: (b, 0)),
            scratch_shapes=[pltpu.VMEM((nHT, M, HT * hd), jnp.bfloat16)],
        ),
        compiler_params=pltpu.CompilerParams(
            dimension_semantics=("parallel", "arbitrary"),
            vmem_limit_bytes=vmem_limit),
    )(x2, prepared['w_fused'], prepared['wo_t'], cq, dq, ck, dk)
    return out2.reshape(B, S, H)


def _reference(x, w_qkv, w_out, fc, *, num_heads, head_dim):
    """Pure-JAX f32 mirror of the PyTorch forward (sdpa, no mask)."""
    B, S, H = x.shape
    qkv = x @ w_qkv.T
    qkv = qkv.reshape(B, S, 3, num_heads, head_dim)
    q, k, v = qkv[:, :, 0], qkv[:, :, 1], qkv[:, :, 2]           # (B,S,nH,hd)

    def rope(z):
        z_ = z.reshape(B, S, num_heads, head_dim // 2, 1, 2)
        fr = fc.reshape(1, S, 1, head_dim // 2, 2, 2)
        return (z_ * fr).sum(-1).reshape(B, S, num_heads, head_dim)

    q, k = rope(q), rope(k)
    q, k, v = (jnp.swapaxes(t, 1, 2) for t in (q, k, v))         # (B,nH,S,hd)
    s = jnp.einsum('bhqd,bhkd->bhqk', q, k) / math.sqrt(head_dim)
    p = jax.nn.softmax(s, axis=-1)
    o = jnp.einsum('bhqk,bhkd->bhqd', p, v)
    o = jnp.swapaxes(o, 1, 2).reshape(B, S, H)
    return o @ w_out.T


if __name__ == "__main__":
    B, S = 2, 8
    num_heads, head_dim = 4, 8
    H = num_heads * head_dim                          # hidden_dim = 32

    key = jax.random.PRNGKey(0)
    kx, kq, ko = jax.random.split(key, 3)
    x = jax.random.normal(kx, (B, S, H), dtype=jnp.float32)

    # deterministic parameters (matches nn.Linear weight shapes, no bias)
    init_std = H ** -0.5
    w_qkv = jax.random.normal(kq, (3 * H, H), dtype=jnp.float32) * init_std
    w_out = jax.random.normal(ko, (H, H), dtype=jnp.float32) * init_std

    # RoPE frequency_cis of shape (S, head_dim//2, 2, 2):
    # frequency_cis[s, p] = [[cos, -sin], [sin, cos]]
    pos = jnp.arange(S, dtype=jnp.float32)[:, None]
    inv = 1.0 / (10000.0 ** (jnp.arange(0, head_dim, 2, dtype=jnp.float32)
                             / head_dim))
    ang = pos * inv[None, :]
    cos, sin = jnp.cos(ang), jnp.sin(ang)
    frequency_cis = jnp.stack(
        [jnp.stack([cos, -sin], axis=-1), jnp.stack([sin, cos], axis=-1)],
        axis=-2)                                      # (S, hd//2, 2, 2)

    prepared = prepare_multi_type_attention_weights(
        w_qkv, w_out, frequency_cis, num_heads=num_heads, head_dim=head_dim)
    out = multi_type_attention_block(x, prepared)
    out = jax.block_until_ready(out)

    ref = _reference(x, w_qkv, w_out, frequency_cis,
                     num_heads=num_heads, head_dim=head_dim)
    assert out.shape == (B, S, H)
    out_f32 = out.astype(jnp.float32)
    err = float(jnp.max(jnp.abs(out_f32 - ref)))
    # bf16 MXU operands + bf16 output -> bf16-level tolerance (recip is exact)
    assert jnp.allclose(out_f32, ref, rtol=5e-2, atol=3e-2), f"max err {err}"

    print("KERNEL_OK")
</pallas_src>

<mosaic_0001>
module attributes {stable_mosaic.version = 11 : i64} {
  func.func @_mha_rope_kernel(%arg0: i32, %arg1: i32, %arg2: memref<16x32xbf16, #tpu.memory_space<vmem>>, %arg3: memref<1x32x96xbf16, #tpu.memory_space<vmem>>, %arg4: memref<32x32xbf16, #tpu.memory_space<vmem>>, %arg5: memref<16x8xf32, #tpu.memory_space<vmem>>, %arg6: memref<16x8xf32, #tpu.memory_space<vmem>>, %arg7: memref<16x8xf32, #tpu.memory_space<vmem>>, %arg8: memref<16x8xf32, #tpu.memory_space<vmem>>, %arg9: memref<16x32xbf16, #tpu.memory_space<vmem>>, %arg10: memref<1x16x32xbf16, #tpu.memory_space<vmem>>) attributes {dimension_semantics = [#tpu.dimension_semantics<parallel>, #tpu.dimension_semantics<arbitrary>], iteration_bounds = array<i64: 1, 1>, scalar_prefetch = 0 : i64, scratch_operands = 1 : i64, tpu.core_type = #tpu.core_type<tc>, window_params = [{transform_indices = @transform_0, window_bounds = array<i64: 16, 32>}, {transform_indices = @transform_1, window_bounds = array<i64: 1, 32, 96>}, {pipeline_mode = #tpu.pipeline_mode<synchronous>, transform_indices = @transform_2, window_bounds = array<i64: 32, 32>}, {pipeline_mode = #tpu.pipeline_mode<synchronous>, transform_indices = @transform_3, window_bounds = array<i64: 16, 8>}, {pipeline_mode = #tpu.pipeline_mode<synchronous>, transform_indices = @transform_4, window_bounds = array<i64: 16, 8>}, {pipeline_mode = #tpu.pipeline_mode<synchronous>, transform_indices = @transform_5, window_bounds = array<i64: 16, 8>}, {pipeline_mode = #tpu.pipeline_mode<synchronous>, transform_indices = @transform_6, window_bounds = array<i64: 16, 8>}, {transform_indices = @transform_7, window_bounds = array<i64: 16, 32>}]} {
    %c0 = arith.constant 0 : index
    %c0_0 = arith.constant 0 : index
    %0 = vector.load %arg2[%c0, %c0_0] : memref<16x32xbf16, #tpu.memory_space<vmem>>, vector<16x32xbf16>
    %c0_1 = arith.constant 0 : index
    %c0_2 = arith.constant 0 : index
    %c0_3 = arith.constant 0 : index
    %1 = vector.load %arg3[%c0_1, %c0_2, %c0_3] : memref<1x32x96xbf16, #tpu.memory_space<vmem>>, vector<1x32x96xbf16>
    %2 = vector.shape_cast %1 : vector<1x32x96xbf16> to vector<32x96xbf16>
    %cst = arith.constant dense<0.000000e+00> : vector<16x96xf32>
    %3 = tpu.matmul %0, %2, %cst {dimension_numbers = #tpu.dot_dimension_numbers<[1], [0], [0], [1], [0, 0, 1, 1], [], []>} : vector<16x32xbf16>, vector<32x96xbf16>, vector<16x96xf32> -> vector<16x96xf32>
    %c0_4 = arith.constant 0 : index
    %c0_5 = arith.constant 0 : index
    %4 = vector.load %arg5[%c0_4, %c0_5] : memref<16x8xf32, #tpu.memory_space<vmem>>, vector<16x8xf32>
    %c0_6 = arith.constant 0 : index
    %c0_7 = arith.constant 0 : index
    %5 = vector.load %arg6[%c0_6, %c0_7] : memref<16x8xf32, #tpu.memory_space<vmem>>, vector<16x8xf32>
    %c0_8 = arith.constant 0 : index
    %c0_9 = arith.constant 0 : index
    %6 = vector.load %arg7[%c0_8, %c0_9] : memref<16x8xf32, #tpu.memory_space<vmem>>, vector<16x8xf32>
    %c0_10 = arith.constant 0 : index
    %c0_11 = arith.constant 0 : index
    %7 = vector.load %arg8[%c0_10, %c0_11] : memref<16x8xf32, #tpu.memory_space<vmem>>, vector<16x8xf32>
    %8 = vector.extract_strided_slice %3 {offsets = [0, 0], sizes = [16, 8], strides = [1, 1]} : vector<16x96xf32> to vector<16x8xf32>
    %9 = vector.extract_strided_slice %3 {offsets = [0, 32], sizes = [16, 8], strides = [1, 1]} : vector<16x96xf32> to vector<16x8xf32>
    %10 = vector.extract_strided_slice %3 {offsets = [0, 64], sizes = [16, 8], strides = [1, 1]} : vector<16x96xf32> to vector<16x8xf32>
    %11 = arith.mulf %8, %4 : vector<16x8xf32>
    %c4_i32 = arith.constant 4 : i32
    %12 = tpu.dynamic_rotate %8 by %c4_i32 dim 1 : vector<16x8xf32>, i32 -> vector<16x8xf32>
    %13 = arith.mulf %12, %5 : vector<16x8xf32>
    %14 = arith.addf %11, %13 : vector<16x8xf32>
    %15 = arith.mulf %9, %6 : vector<16x8xf32>
    %c4_i32_12 = arith.constant 4 : i32
    %16 = tpu.dynamic_rotate %9 by %c4_i32_12 dim 1 : vector<16x8xf32>, i32 -> vector<16x8xf32>
    %17 = arith.mulf %16, %7 : vector<16x8xf32>
    %18 = arith.addf %15, %17 : vector<16x8xf32>
    %19 = arith.truncf %14 : vector<16x8xf32> to vector<16x8xbf16>
    %20 = arith.truncf %18 : vector<16x8xf32> to vector<16x8xbf16>
    %21 = arith.truncf %10 : vector<16x8xf32> to vector<16x8xbf16>
    %22 = vector.extract_strided_slice %19 {offsets = [0, 0], sizes = [8, 8], strides = [1, 1]} : vector<16x8xbf16> to vector<8x8xbf16>
    %23 = vector.extract_strided_slice %20 {offsets = [0, 0], sizes = [8, 8], strides = [1, 1]} : vector<16x8xbf16> to vector<8x8xbf16>
    %cst_13 = arith.constant dense<0.000000e+00> : vector<8x8xf32>
    %24 = tpu.matmul %22, %23, %cst_13 {dimension_numbers = #tpu.dot_dimension_numbers<[1], [1], [0], [0], [0, 0, 1, 0], [], []>} : vector<8x8xbf16>, vector<8x8xbf16>, vector<8x8xf32> -> vector<8x8xf32>
    %cst_14 = arith.constant dense<0xFF800000> : vector<8xf32>
    %25 = vector.multi_reduction <maximumf>, %24, %cst_14 [1] : vector<8x8xf32> to vector<8xf32>
    %26 = vector.shape_cast %25 : vector<8xf32> to vector<8x1xf32>
    %27 = vector.broadcast %26 : vector<8x1xf32> to vector<8x8xf32>
    %28 = arith.subf %24, %27 : vector<8x8xf32>
    %29 = math.exp %28 : vector<8x8xf32>
    %cst_15 = arith.constant dense<0.000000e+00> : vector<8xf32>
    %30 = vector.multi_reduction <add>, %29, %cst_15 [1] : vector<8x8xf32> to vector<8xf32>
    %31 = vector.shape_cast %30 : vector<8xf32> to vector<8x1xf32>
    %32 = arith.truncf %29 : vector<8x8xf32> to vector<8x8xbf16>
    %33 = vector.extract_strided_slice %21 {offsets = [0, 0], sizes = [8, 8], strides = [1, 1]} : vector<16x8xbf16> to vector<8x8xbf16>
    %cst_16 = arith.constant dense<0.000000e+00> : vector<8x8xf32>
    %34 = tpu.matmul %32, %33, %cst_16 {dimension_numbers = #tpu.dot_dimension_numbers<[1], [0], [0], [1], [0, 0, 1, 1], [], []>} : vector<8x8xbf16>, vector<8x8xbf16>, vector<8x8xf32> -> vector<8x8xf32>
    %35 = tpu.reciprocal %31 : vector<8x1xf32> -> vector<8x1xf32>
    %36 = vector.broadcast %35 : vector<8x1xf32> to vector<8x8xf32>
    %37 = arith.mulf %34, %36 : vector<8x8xf32>
    %38 = arith.truncf %37 : vector<8x8xf32> to vector<8x8xbf16>
    %39 = arith.index_cast %arg1 : i32 to index
    %c0_17 = arith.constant 0 : index
    %c0_18 = arith.constant 0 : index
    %40 = vector.load %arg10[%39, %c0_17, %c0_18] : memref<1x16x32xbf16, #tpu.memory_space<vmem>>, vector<1x8x8xbf16>
    %41 = vector.shape_cast %40 : vector<1x8x8xbf16> to vector<8x8xbf16>
    %42 = vector.shape_cast %38 : vector<8x8xbf16> to vector<1x8x8xbf16>
    tpu.vector_store %arg10[%39, %c0_17, %c0_18], %42 {strides = array<i32>} : memref<1x16x32xbf16, #tpu.memory_space<vmem>>, vector<1x8x8xbf16>,
    %43 = vector.extract_strided_slice %19 {offsets = [8, 0], sizes = [8, 8], strides = [1, 1]} : vector<16x8xbf16> to vector<8x8xbf16>
    %44 = vector.extract_strided_slice %20 {offsets = [8, 0], sizes = [8, 8], strides = [1, 1]} : vector<16x8xbf16> to vector<8x8xbf16>
    %cst_19 = arith.constant dense<0.000000e+00> : vector<8x8xf32>
    %45 = tpu.matmul %43, %44, %cst_19 {dimension_numbers = #tpu.dot_dimension_numbers<[1], [1], [0], [0], [0, 0, 1, 0], [], []>} : vector<8x8xbf16>, vector<8x8xbf16>, vector<8x8xf32> -> vector<8x8xf32>
    %cst_20 = arith.constant dense<0xFF800000> : vector<8xf32>
    %46 = vector.multi_reduction <maximumf>, %45, %cst_20 [1] : vector<8x8xf32> to vector<8xf32>
    %47 = vector.shape_cast %46 : vector<8xf32> to vector<8x1xf32>
    %48 = vector.broadcast %47 : vector<8x1xf32> to vector<8x8xf32>
    %49 = arith.subf %45, %48 : vector<8x8xf32>
    %50 = math.exp %49 : vector<8x8xf32>
    %cst_21 = arith.constant dense<0.000000e+00> : vector<8xf32>
    %51 = vector.multi_reduction <add>, %50, %cst_21 [1] : vector<8x8xf32> to vector<8xf32>
    %52 = vector.shape_cast %51 : vector<8xf32> to vector<8x1xf32>
    %53 = arith.truncf %50 : vector<8x8xf32> to vector<8x8xbf16>
    %54 = vector.extract_strided_slice %21 {offsets = [8, 0], sizes = [8, 8], strides = [1, 1]} : vector<16x8xbf16> to vector<8x8xbf16>
    %cst_22 = arith.constant dense<0.000000e+00> : vector<8x8xf32>
    %55 = tpu.matmul %53, %54, %cst_22 {dimension_numbers = #tpu.dot_dimension_numbers<[1], [0], [0], [1], [0, 0, 1, 1], [], []>} : vector<8x8xbf16>, vector<8x8xbf16>, vector<8x8xf32> -> vector<8x8xf32>
    %56 = tpu.reciprocal %52 : vector<8x1xf32> -> vector<8x1xf32>
    %57 = vector.broadcast %56 : vector<8x1xf32> to vector<8x8xf32>
    %58 = arith.mulf %55, %57 : vector<8x8xf32>
    %59 = arith.truncf %58 : vector<8x8xf32> to vector<8x8xbf16>
    %60 = arith.index_cast %arg1 : i32 to index
    %c8 = arith.constant 8 : index
    %c0_23 = arith.constant 0 : index
    %61 = vector.load %arg10[%60, %c8, %c0_23] : memref<1x16x32xbf16, #tpu.memory_space<vmem>>, vector<1x8x8xbf16>
    %62 = vector.shape_cast %61 : vector<1x8x8xbf16> to vector<8x8xbf16>
    %63 = vector.shape_cast %59 : vector<8x8xbf16> to vector<1x8x8xbf16>
    tpu.vector_store %arg10[%60, %c8, %c0_23], %63 {strides = array<i32>} : memref<1x16x32xbf16, #tpu.memory_space<vmem>>, vector<1x8x8xbf16>,
    %64 = vector.extract_strided_slice %3 {offsets = [0, 8], sizes = [16, 8], strides = [1, 1]} : vector<16x96xf32> to vector<16x8xf32>
    %65 = vector.extract_strided_slice %3 {offsets = [0, 40], sizes = [16, 8], strides = [1, 1]} : vector<16x96xf32> to vector<16x8xf32>
    %66 = vector.extract_strided_slice %3 {offsets = [0, 72], sizes = [16, 8], strides = [1, 1]} : vector<16x96xf32> to vector<16x8xf32>
    %67 = arith.mulf %64, %4 : vector<16x8xf32>
    %c4_i32_24 = arith.constant 4 : i32
    %68 = tpu.dynamic_rotate %64 by %c4_i32_24 dim 1 : vector<16x8xf32>, i32 -> vector<16x8xf32>
    %69 = arith.mulf %68, %5 : vector<16x8xf32>
    %70 = arith.addf %67, %69 : vector<16x8xf32>
    %71 = arith.mulf %65, %6 : vector<16x8xf32>
    %c4_i32_25 = arith.constant 4 : i32
    %72 = tpu.dynamic_rotate %65 by %c4_i32_25 dim 1 : vector<16x8xf32>, i32 -> vector<16x8xf32>
    %73 = arith.mulf %72, %7 : vector<16x8xf32>
    %74 = arith.addf %71, %73 : vector<16x8xf32>
    %75 = arith.truncf %70 : vector<16x8xf32> to vector<16x8xbf16>
    %76 = arith.truncf %74 : vector<16x8xf32> to vector<16x8xbf16>
    %77 = arith.truncf %66 : vector<16x8xf32> to vector<16x8xbf16>
    %78 = vector.extract_strided_slice %75 {offsets = [0, 0], sizes = [8, 8], strides = [1, 1]} : vector<16x8xbf16> to vector<8x8xbf16>
    %79 = vector.extract_strided_slice %76 {offsets = [0, 0], sizes = [8, 8], strides = [1, 1]} : vector<16x8xbf16> to vector<8x8xbf16>
    %cst_26 = arith.constant dense<0.000000e+00> : vector<8x8xf32>
    %80 = tpu.matmul %78, %79, %cst_26 {dimension_numbers = #tpu.dot_dimension_numbers<[1], [1], [0], [0], [0, 0, 1, 0], [], []>} : vector<8x8xbf16>, vector<8x8xbf16>, vector<8x8xf32> -> vector<8x8xf32>
    %cst_27 = arith.constant dense<0xFF800000> : vector<8xf32>
    %81 = vector.multi_reduction <maximumf>, %80, %cst_27 [1] : vector<8x8xf32> to vector<8xf32>
    %82 = vector.shape_cast %81 : vector<8xf32> to vector<8x1xf32>
    %83 = vector.broadcast %82 : vector<8x1xf32> to vector<8x8xf32>
    %84 = arith.subf %80, %83 : vector<8x8xf32>
    %85 = math.exp %84 : vector<8x8xf32>
    %cst_28 = arith.constant dense<0.000000e+00> : vector<8xf32>
    %86 = vector.multi_reduction <add>, %85, %cst_28 [1] : vector<8x8xf32> to vector<8xf32>
    %87 = vector.shape_cast %86 : vector<8xf32> to vector<8x1xf32>
    %88 = arith.truncf %85 : vector<8x8xf32> to vector<8x8xbf16>
    %89 = vector.extract_strided_slice %77 {offsets = [0, 0], sizes = [8, 8], strides = [1, 1]} : vector<16x8xbf16> to vector<8x8xbf16>
    %cst_29 = arith.constant dense<0.000000e+00> : vector<8x8xf32>
    %90 = tpu.matmul %88, %89, %cst_29 {dimension_numbers = #tpu.dot_dimension_numbers<[1], [0], [0], [1], [0, 0, 1, 1], [], []>} : vector<8x8xbf16>, vector<8x8xbf16>, vector<8x8xf32> -> vector<8x8xf32>
    %91 = tpu.reciprocal %87 : vector<8x1xf32> -> vector<8x1xf32>
    %92 = vector.broadcast %91 : vector<8x1xf32> to vector<8x8xf32>
    %93 = arith.mulf %90, %92 : vector<8x8xf32>
    %94 = arith.truncf %93 : vector<8x8xf32> to vector<8x8xbf16>
    %95 = arith.index_cast %arg1 : i32 to index
    %c0_30 = arith.constant 0 : index
    %c8_31 = arith.constant 8 : index
    %96 = vector.load %arg10[%95, %c0_30, %c8_31] : memref<1x16x32xbf16, #tpu.memory_space<vmem>>, vector<1x8x8xbf16>
    %97 = vector.shape_cast %96 : vector<1x8x8xbf16> to vector<8x8xbf16>
    %98 = vector.shape_cast %94 : vector<8x8xbf16> to vector<1x8x8xbf16>
    tpu.vector_store %arg10[%95, %c0_30, %c8_31], %98 {strides = array<i32>} : memref<1x16x32xbf16, #tpu.memory_space<vmem>>, vector<1x8x8xbf16>,
    %99 = vector.extract_strided_slice %75 {offsets = [8, 0], sizes = [8, 8], strides = [1, 1]} : vector<16x8xbf16> to vector<8x8xbf16>
    %100 = vector.extract_strided_slice %76 {offsets = [8, 0], sizes = [8, 8], strides = [1, 1]} : vector<16x8xbf16> to vector<8x8xbf16>
    %cst_32 = arith.constant dense<0.000000e+00> : vector<8x8xf32>
    %101 = tpu.matmul %99, %100, %cst_32 {dimension_numbers = #tpu.dot_dimension_numbers<[1], [1], [0], [0], [0, 0, 1, 0], [], []>} : vector<8x8xbf16>, vector<8x8xbf16>, vector<8x8xf32> -> vector<8x8xf32>
    %cst_33 = arith.constant dense<0xFF800000> : vector<8xf32>
    %102 = vector.multi_reduction <maximumf>, %101, %cst_33 [1] : vector<8x8xf32> to vector<8xf32>
    %103 = vector.shape_cast %102 : vector<8xf32> to vector<8x1xf32>
    %104 = vector.broadcast %103 : vector<8x1xf32> to vector<8x8xf32>
    %105 = arith.subf %101, %104 : vector<8x8xf32>
    %106 = math.exp %105 : vector<8x8xf32>
    %cst_34 = arith.constant dense<0.000000e+00> : vector<8xf32>
    %107 = vector.multi_reduction <add>, %106, %cst_34 [1] : vector<8x8xf32> to vector<8xf32>
    %108 = vector.shape_cast %107 : vector<8xf32> to vector<8x1xf32>
    %109 = arith.truncf %106 : vector<8x8xf32> to vector<8x8xbf16>
    %110 = vector.extract_strided_slice %77 {offsets = [8, 0], sizes = [8, 8], strides = [1, 1]} : vector<16x8xbf16> to vector<8x8xbf16>
    %cst_35 = arith.constant dense<0.000000e+00> : vector<8x8xf32>
    %111 = tpu.matmul %109, %110, %cst_35 {dimension_numbers = #tpu.dot_dimension_numbers<[1], [0], [0], [1], [0, 0, 1, 1], [], []>} : vector<8x8xbf16>, vector<8x8xbf16>, vector<8x8xf32> -> vector<8x8xf32>
    %112 = tpu.reciprocal %108 : vector<8x1xf32> -> vector<8x1xf32>
    %113 = vector.broadcast %112 : vector<8x1xf32> to vector<8x8xf32>
    %114 = arith.mulf %111, %113 : vector<8x8xf32>
    %115 = arith.truncf %114 : vector<8x8xf32> to vector<8x8xbf16>
    %116 = arith.index_cast %arg1 : i32 to index
    %c8_36 = arith.constant 8 : index
    %c8_37 = arith.constant 8 : index
    %117 = vector.load %arg10[%116, %c8_36, %c8_37] : memref<1x16x32xbf16, #tpu.memory_space<vmem>>, vector<1x8x8xbf16>
    %118 = vector.shape_cast %117 : vector<1x8x8xbf16> to vector<8x8xbf16>
    %119 = vector.shape_cast %115 : vector<8x8xbf16> to vector<1x8x8xbf16>
    tpu.vector_store %arg10[%116, %c8_36, %c8_37], %119 {strides = array<i32>} : memref<1x16x32xbf16, #tpu.memory_space<vmem>>, vector<1x8x8xbf16>,
    %120 = vector.extract_strided_slice %3 {offsets = [0, 16], sizes = [16, 8], strides = [1, 1]} : vector<16x96xf32> to vector<16x8xf32>
    %121 = vector.extract_strided_slice %3 {offsets = [0, 48], sizes = [16, 8], strides = [1, 1]} : vector<16x96xf32> to vector<16x8xf32>
    %122 = vector.extract_strided_slice %3 {offsets = [0, 80], sizes = [16, 8], strides = [1, 1]} : vector<16x96xf32> to vector<16x8xf32>
    %123 = arith.mulf %120, %4 : vector<16x8xf32>
    %c4_i32_38 = arith.constant 4 : i32
    %124 = tpu.dynamic_rotate %120 by %c4_i32_38 dim 1 : vector<16x8xf32>, i32 -> vector<16x8xf32>
    %125 = arith.mulf %124, %5 : vector<16x8xf32>
    %126 = arith.addf %123, %125 : vector<16x8xf32>
    %127 = arith.mulf %121, %6 : vector<16x8xf32>
    %c4_i32_39 = arith.constant 4 : i32
    %128 = tpu.dynamic_rotate %121 by %c4_i32_39 dim 1 : vector<16x8xf32>, i32 -> vector<16x8xf32>
    %129 = arith.mulf %128, %7 : vector<16x8xf32>
    %130 = arith.addf %127, %129 : vector<16x8xf32>
    %131 = arith.truncf %126 : vector<16x8xf32> to vector<16x8xbf16>
    %132 = arith.truncf %130 : vector<16x8xf32> to vector<16x8xbf16>
    %133 = arith.truncf %122 : vector<16x8xf32> to vector<16x8xbf16>
    %134 = vector.extract_strided_slice %131 {offsets = [0, 0], sizes = [8, 8], strides = [1, 1]} : vector<16x8xbf16> to vector<8x8xbf16>
    %135 = vector.extract_strided_slice %132 {offsets = [0, 0], sizes = [8, 8], strides = [1, 1]} : vector<16x8xbf16> to vector<8x8xbf16>
    %cst_40 = arith.constant dense<0.000000e+00> : vector<8x8xf32>
    %136 = tpu.matmul %134, %135, %cst_40 {dimension_numbers = #tpu.dot_dimension_numbers<[1], [1], [0], [0], [0, 0, 1, 0], [], []>} : vector<8x8xbf16>, vector<8x8xbf16>, vector<8x8xf32> -> vector<8x8xf32>
    %cst_41 = arith.constant dense<0xFF800000> : vector<8xf32>
    %137 = vector.multi_reduction <maximumf>, %136, %cst_41 [1] : vector<8x8xf32> to vector<8xf32>
    %138 = vector.shape_cast %137 : vector<8xf32> to vector<8x1xf32>
    %139 = vector.broadcast %138 : vector<8x1xf32> to vector<8x8xf32>
    %140 = arith.subf %136, %139 : vector<8x8xf32>
    %141 = math.exp %140 : vector<8x8xf32>
    %cst_42 = arith.constant dense<0.000000e+00> : vector<8xf32>
    %142 = vector.multi_reduction <add>, %141, %cst_42 [1] : vector<8x8xf32> to vector<8xf32>
    %143 = vector.shape_cast %142 : vector<8xf32> to vector<8x1xf32>
    %144 = arith.truncf %141 : vector<8x8xf32> to vector<8x8xbf16>
    %145 = vector.extract_strided_slice %133 {offsets = [0, 0], sizes = [8, 8], strides = [1, 1]} : vector<16x8xbf16> to vector<8x8xbf16>
    %cst_43 = arith.constant dense<0.000000e+00> : vector<8x8xf32>
    %146 = tpu.matmul %144, %145, %cst_43 {dimension_numbers = #tpu.dot_dimension_numbers<[1], [0], [0], [1], [0, 0, 1, 1], [], []>} : vector<8x8xbf16>, vector<8x8xbf16>, vector<8x8xf32> -> vector<8x8xf32>
    %147 = tpu.reciprocal %143 : vector<8x1xf32> -> vector<8x1xf32>
    %148 = vector.broadcast %147 : vector<8x1xf32> to vector<8x8xf32>
    %149 = arith.mulf %146, %148 : vector<8x8xf32>
    %150 = arith.truncf %149 : vector<8x8xf32> to vector<8x8xbf16>
    %151 = arith.index_cast %arg1 : i32 to index
    %c0_44 = arith.constant 0 : index
    %c16 = arith.constant 16 : index
    %152 = vector.load %arg10[%151, %c0_44, %c16] : memref<1x16x32xbf16, #tpu.memory_space<vmem>>, vector<1x8x8xbf16>
    %153 = vector.shape_cast %152 : vector<1x8x8xbf16> to vector<8x8xbf16>
    %154 = vector.shape_cast %150 : vector<8x8xbf16> to vector<1x8x8xbf16>
    tpu.vector_store %arg10[%151, %c0_44, %c16], %154 {strides = array<i32>} : memref<1x16x32xbf16, #tpu.memory_space<vmem>>, vector<1x8x8xbf16>,
    %155 = vector.extract_strided_slice %131 {offsets = [8, 0], sizes = [8, 8], strides = [1, 1]} : vector<16x8xbf16> to vector<8x8xbf16>
    %156 = vector.extract_strided_slice %132 {offsets = [8, 0], sizes = [8, 8], strides = [1, 1]} : vector<16x8xbf16> to vector<8x8xbf16>
    %cst_45 = arith.constant dense<0.000000e+00> : vector<8x8xf32>
    %157 = tpu.matmul %155, %156, %cst_45 {dimension_numbers = #tpu.dot_dimension_numbers<[1], [1], [0], [0], [0, 0, 1, 0], [], []>} : vector<8x8xbf16>, vector<8x8xbf16>, vector<8x8xf32> -> vector<8x8xf32>
    %cst_46 = arith.constant dense<0xFF800000> : vector<8xf32>
    %158 = vector.multi_reduction <maximumf>, %157, %cst_46 [1] : vector<8x8xf32> to vector<8xf32>
    %159 = vector.shape_cast %158 : vector<8xf32> to vector<8x1xf32>
    %160 = vector.broadcast %159 : vector<8x1xf32> to vector<8x8xf32>
    %161 = arith.subf %157, %160 : vector<8x8xf32>
    %162 = math.exp %161 : vector<8x8xf32>
    %cst_47 = arith.constant dense<0.000000e+00> : vector<8xf32>
    %163 = vector.multi_reduction <add>, %162, %cst_47 [1] : vector<8x8xf32> to vector<8xf32>
    %164 = vector.shape_cast %163 : vector<8xf32> to vector<8x1xf32>
    %165 = arith.truncf %162 : vector<8x8xf32> to vector<8x8xbf16>
    %166 = vector.extract_strided_slice %133 {offsets = [8, 0], sizes = [8, 8], strides = [1, 1]} : vector<16x8xbf16> to vector<8x8xbf16>
    %cst_48 = arith.constant dense<0.000000e+00> : vector<8x8xf32>
    %167 = tpu.matmul %165, %166, %cst_48 {dimension_numbers = #tpu.dot_dimension_numbers<[1], [0], [0], [1], [0, 0, 1, 1], [], []>} : vector<8x8xbf16>, vector<8x8xbf16>, vector<8x8xf32> -> vector<8x8xf32>
    %168 = tpu.reciprocal %164 : vector<8x1xf32> -> vector<8x1xf32>
    %169 = vector.broadcast %168 : vector<8x1xf32> to vector<8x8xf32>
    %170 = arith.mulf %167, %169 : vector<8x8xf32>
    %171 = arith.truncf %170 : vector<8x8xf32> to vector<8x8xbf16>
    %172 = arith.index_cast %arg1 : i32 to index
    %c8_49 = arith.constant 8 : index
    %c16_50 = arith.constant 16 : index
    %173 = vector.load %arg10[%172, %c8_49, %c16_50] : memref<1x16x32xbf16, #tpu.memory_space<vmem>>, vector<1x8x8xbf16>
    %174 = vector.shape_cast %173 : vector<1x8x8xbf16> to vector<8x8xbf16>
    %175 = vector.shape_cast %171 : vector<8x8xbf16> to vector<1x8x8xbf16>
    tpu.vector_store %arg10[%172, %c8_49, %c16_50], %175 {strides = array<i32>} : memref<1x16x32xbf16, #tpu.memory_space<vmem>>, vector<1x8x8xbf16>,
    %176 = vector.extract_strided_slice %3 {offsets = [0, 24], sizes = [16, 8], strides = [1, 1]} : vector<16x96xf32> to vector<16x8xf32>
    %177 = vector.extract_strided_slice %3 {offsets = [0, 56], sizes = [16, 8], strides = [1, 1]} : vector<16x96xf32> to vector<16x8xf32>
    %178 = vector.extract_strided_slice %3 {offsets = [0, 88], sizes = [16, 8], strides = [1, 1]} : vector<16x96xf32> to vector<16x8xf32>
    %179 = arith.mulf %176, %4 : vector<16x8xf32>
    %c4_i32_51 = arith.constant 4 : i32
    %180 = tpu.dynamic_rotate %176 by %c4_i32_51 dim 1 : vector<16x8xf32>, i32 -> vector<16x8xf32>
    %181 = arith.mulf %180, %5 : vector<16x8xf32>
    %182 = arith.addf %179, %181 : vector<16x8xf32>
    %183 = arith.mulf %177, %6 : vector<16x8xf32>
    %c4_i32_52 = arith.constant 4 : i32
    %184 = tpu.dynamic_rotate %177 by %c4_i32_52 dim 1 : vector<16x8xf32>, i32 -> vector<16x8xf32>
    %185 = arith.mulf %184, %7 : vector<16x8xf32>
    %186 = arith.addf %183, %185 : vector<16x8xf32>
    %187 = arith.truncf %182 : vector<16x8xf32> to vector<16x8xbf16>
    %188 = arith.truncf %186 : vector<16x8xf32> to vector<16x8xbf16>
    %189 = arith.truncf %178 : vector<16x8xf32> to vector<16x8xbf16>
    %190 = vector.extract_strided_slice %187 {offsets = [0, 0], sizes = [8, 8], strides = [1, 1]} : vector<16x8xbf16> to vector<8x8xbf16>
    %191 = vector.extract_strided_slice %188 {offsets = [0, 0], sizes = [8, 8], strides = [1, 1]} : vector<16x8xbf16> to vector<8x8xbf16>
    %cst_53 = arith.constant dense<0.000000e+00> : vector<8x8xf32>
    %192 = tpu.matmul %190, %191, %cst_53 {dimension_numbers = #tpu.dot_dimension_numbers<[1], [1], [0], [0], [0, 0, 1, 0], [], []>} : vector<8x8xbf16>, vector<8x8xbf16>, vector<8x8xf32> -> vector<8x8xf32>
    %cst_54 = arith.constant dense<0xFF800000> : vector<8xf32>
    %193 = vector.multi_reduction <maximumf>, %192, %cst_54 [1] : vector<8x8xf32> to vector<8xf32>
    %194 = vector.shape_cast %193 : vector<8xf32> to vector<8x1xf32>
    %195 = vector.broadcast %194 : vector<8x1xf32> to vector<8x8xf32>
    %196 = arith.subf %192, %195 : vector<8x8xf32>
    %197 = math.exp %196 : vector<8x8xf32>
    %cst_55 = arith.constant dense<0.000000e+00> : vector<8xf32>
    %198 = vector.multi_reduction <add>, %197, %cst_55 [1] : vector<8x8xf32> to vector<8xf32>
    %199 = vector.shape_cast %198 : vector<8xf32> to vector<8x1xf32>
    %200 = arith.truncf %197 : vector<8x8xf32> to vector<8x8xbf16>
    %201 = vector.extract_strided_slice %189 {offsets = [0, 0], sizes = [8, 8], strides = [1, 1]} : vector<16x8xbf16> to vector<8x8xbf16>
    %cst_56 = arith.constant dense<0.000000e+00> : vector<8x8xf32>
    %202 = tpu.matmul %200, %201, %cst_56 {dimension_numbers = #tpu.dot_dimension_numbers<[1], [0], [0], [1], [0, 0, 1, 1], [], []>} : vector<8x8xbf16>, vector<8x8xbf16>, vector<8x8xf32> -> vector<8x8xf32>
    %203 = tpu.reciprocal %199 : vector<8x1xf32> -> vector<8x1xf32>
    %204 = vector.broadcast %203 : vector<8x1xf32> to vector<8x8xf32>
    %205 = arith.mulf %202, %204 : vector<8x8xf32>
    %206 = arith.truncf %205 : vector<8x8xf32> to vector<8x8xbf16>
    %207 = arith.index_cast %arg1 : i32 to index
    %c0_57 = arith.constant 0 : index
    %c24 = arith.constant 24 : index
    %208 = vector.load %arg10[%207, %c0_57, %c24] : memref<1x16x32xbf16, #tpu.memory_space<vmem>>, vector<1x8x8xbf16>
    %209 = vector.shape_cast %208 : vector<1x8x8xbf16> to vector<8x8xbf16>
    %210 = vector.shape_cast %206 : vector<8x8xbf16> to vector<1x8x8xbf16>
    tpu.vector_store %arg10[%207, %c0_57, %c24], %210 {strides = array<i32>} : memref<1x16x32xbf16, #tpu.memory_space<vmem>>, vector<1x8x8xbf16>,
    %211 = vector.extract_strided_slice %187 {offsets = [8, 0], sizes = [8, 8], strides = [1, 1]} : vector<16x8xbf16> to vector<8x8xbf16>
    %212 = vector.extract_strided_slice %188 {offsets = [8, 0], sizes = [8, 8], strides = [1, 1]} : vector<16x8xbf16> to vector<8x8xbf16>
    %cst_58 = arith.constant dense<0.000000e+00> : vector<8x8xf32>
    %213 = tpu.matmul %211, %212, %cst_58 {dimension_numbers = #tpu.dot_dimension_numbers<[1], [1], [0], [0], [0, 0, 1, 0], [], []>} : vector<8x8xbf16>, vector<8x8xbf16>, vector<8x8xf32> -> vector<8x8xf32>
    %cst_59 = arith.constant dense<0xFF800000> : vector<8xf32>
    %214 = vector.multi_reduction <maximumf>, %213, %cst_59 [1] : vector<8x8xf32> to vector<8xf32>
    %215 = vector.shape_cast %214 : vector<8xf32> to vector<8x1xf32>
    %216 = vector.broadcast %215 : vector<8x1xf32> to vector<8x8xf32>
    %217 = arith.subf %213, %216 : vector<8x8xf32>
    %218 = math.exp %217 : vector<8x8xf32>
    %cst_60 = arith.constant dense<0.000000e+00> : vector<8xf32>
    %219 = vector.multi_reduction <add>, %218, %cst_60 [1] : vector<8x8xf32> to vector<8xf32>
    %220 = vector.shape_cast %219 : vector<8xf32> to vector<8x1xf32>
    %221 = arith.truncf %218 : vector<8x8xf32> to vector<8x8xbf16>
    %222 = vector.extract_strided_slice %189 {offsets = [8, 0], sizes = [8, 8], strides = [1, 1]} : vector<16x8xbf16> to vector<8x8xbf16>
    %cst_61 = arith.constant dense<0.000000e+00> : vector<8x8xf32>
    %223 = tpu.matmul %221, %222, %cst_61 {dimension_numbers = #tpu.dot_dimension_numbers<[1], [0], [0], [1], [0, 0, 1, 1], [], []>} : vector<8x8xbf16>, vector<8x8xbf16>, vector<8x8xf32> -> vector<8x8xf32>
    %224 = tpu.reciprocal %220 : vector<8x1xf32> -> vector<8x1xf32>
    %225 = vector.broadcast %224 : vector<8x1xf32> to vector<8x8xf32>
    %226 = arith.mulf %223, %225 : vector<8x8xf32>
    %227 = arith.truncf %226 : vector<8x8xf32> to vector<8x8xbf16>
    %228 = arith.index_cast %arg1 : i32 to index
    %c8_62 = arith.constant 8 : index
    %c24_63 = arith.constant 24 : index
    %229 = vector.load %arg10[%228, %c8_62, %c24_63] : memref<1x16x32xbf16, #tpu.memory_space<vmem>>, vector<1x8x8xbf16>
    %230 = vector.shape_cast %229 : vector<1x8x8xbf16> to vector<8x8xbf16>
    %231 = vector.shape_cast %227 : vector<8x8xbf16> to vector<1x8x8xbf16>
    tpu.vector_store %arg10[%228, %c8_62, %c24_63], %231 {strides = array<i32>} : memref<1x16x32xbf16, #tpu.memory_space<vmem>>, vector<1x8x8xbf16>,
    %c0_i32 = arith.constant 0 : i32
    %232 = arith.cmpi eq, %arg1, %c0_i32 : i32
    %233 = arith.extui %232 : i1 to i32
    %c0_i32_64 = arith.constant 0 : i32
    %234 = arith.cmpi ne, %233, %c0_i32_64 : i32
    scf.if %234 {
      %c0_65 = arith.constant 0 : index
      %c0_66 = arith.constant 0 : index
      %c0_67 = arith.constant 0 : index
      %235 = vector.load %arg10[%c0_65, %c0_66, %c0_67] : memref<1x16x32xbf16, #tpu.memory_space<vmem>>, vector<1x16x32xbf16>
      %236 = vector.shape_cast %235 : vector<1x16x32xbf16> to vector<16x32xbf16>
      %c0_68 = arith.constant 0 : index
      %c0_69 = arith.constant 0 : index
      %237 = vector.load %arg4[%c0_68, %c0_69] : memref<32x32xbf16, #tpu.memory_space<vmem>>, vector<32x32xbf16>
      %cst_70 = arith.constant dense<0.000000e+00> : vector<16x32xf32>
      %238 = tpu.matmul %236, %237, %cst_70 {dimension_numbers = #tpu.dot_dimension_numbers<[1], [0], [0], [1], [0, 0, 1, 1], [], []>} : vector<16x32xbf16>, vector<32x32xbf16>, vector<16x32xf32> -> vector<16x32xf32>
      %239 = arith.truncf %238 : vector<16x32xf32> to vector<16x32xbf16>
      %c0_71 = arith.constant 0 : index
      %c0_72 = arith.constant 0 : index
      %240 = vector.load %arg9[%c0_71, %c0_72] : memref<16x32xbf16, #tpu.memory_space<vmem>>, vector<16x32xbf16>
      tpu.vector_store %arg9[%c0_71, %c0_72], %239 {strides = array<i32>} : memref<16x32xbf16, #tpu.memory_space<vmem>>, vector<16x32xbf16>,
    } else {
    }
    return
  }
  func.func @transform_0(%arg0: i32, %arg1: i32) -> (i32, i32) {
    %c0_i32 = arith.constant 0 : i32
    %c0_i32_0 = arith.constant 0 : i32
    return %arg0, %c0_i32 : i32, i32
  }
  func.func @transform_1(%arg0: i32, %arg1: i32) -> (i32, i32, i32) {
    %c0_i32 = arith.constant 0 : i32
    %c0_i32_0 = arith.constant 0 : i32
    %c0_i32_1 = arith.constant 0 : i32
    return %arg1, %c0_i32, %c0_i32_0 : i32, i32, i32
  }
  func.func @transform_2(%arg0: i32, %arg1: i32) -> (i32, i32) {
    %c0_i32 = arith.constant 0 : i32
    %c0_i32_0 = arith.constant 0 : i32
    %c0_i32_1 = arith.constant 0 : i32
    return %c0_i32, %c0_i32_0 : i32, i32
  }
  func.func @transform_3(%arg0: i32, %arg1: i32) -> (i32, i32) {
    %c0_i32 = arith.constant 0 : i32
    %c0_i32_0 = arith.constant 0 : i32
    %c0_i32_1 = arith.constant 0 : i32
    return %c0_i32, %c0_i32_0 : i32, i32
  }
  func.func @transform_4(%arg0: i32, %arg1: i32) -> (i32, i32) {
    %c0_i32 = arith.constant 0 : i32
    %c0_i32_0 = arith.constant 0 : i32
    %c0_i32_1 = arith.constant 0 : i32
    return %c0_i32, %c0_i32_0 : i32, i32
  }
  func.func @transform_5(%arg0: i32, %arg1: i32) -> (i32, i32) {
    %c0_i32 = arith.constant 0 : i32
    %c0_i32_0 = arith.constant 0 : i32
    %c0_i32_1 = arith.constant 0 : i32
    return %c0_i32, %c0_i32_0 : i32, i32
  }
  func.func @transform_6(%arg0: i32, %arg1: i32) -> (i32, i32) {
    %c0_i32 = arith.constant 0 : i32
    %c0_i32_0 = arith.constant 0 : i32
    %c0_i32_1 = arith.constant 0 : i32
    return %c0_i32, %c0_i32_0 : i32, i32
  }
  func.func @transform_7(%arg0: i32, %arg1: i32) -> (i32, i32) {
    %c0_i32 = arith.constant 0 : i32
    %c0_i32_0 = arith.constant 0 : i32
    return %arg0, %c0_i32 : i32, i32
  }
}

</mosaic_0001>

<llo_original>
// kernel: tpu_custom_call.1
$region0: #{tpu_custom_call.1}
  #allocation0 [shape = 'u32[]', space=smem, size = 0x4, offset = 0x4, fixed_abs, tag = 'smem constant byte address 0x4 - core index']
  #allocation1 [shape = 'u32[144,128]{1,0:T(1,128)}', space=vmem, size = 0x12000, scoped, tag = 'internal scratch']
  #allocation2 [shape = 'bf16[1,16,32]{2,1,0:T(16,128)(2,1)}', space=vmem, size = 0x1000, scoped, tag = 'scratch operand']
  %s0 = inlined_call_operand.vmem [shape: bf16[16,32], index: 0, kind: input, shape index: {}]
  %s1 = inlined_call_operand.vmem [shape: bf16[1,32,96], index: 1, kind: input, shape index: {}]
  %s2 = inlined_call_operand.vmem [shape: bf16[32,32], index: 2, kind: input, shape index: {}]
  %s3 = inlined_call_operand.vmem [shape: f32[16,8], index: 3, kind: input, shape index: {}]
  %s4 = inlined_call_operand.vmem [shape: f32[16,8], index: 4, kind: input, shape index: {}]
  %s5 = inlined_call_operand.vmem [shape: f32[16,8], index: 5, kind: input, shape index: {}]
  %s6 = inlined_call_operand.vmem [shape: f32[16,8], index: 6, kind: input, shape index: {}]
  %s7 = inlined_call_operand.hbm [shape: bf16[16,32], index: 7, kind: output, shape index: {}]
  %s8 = sld [smem:[#allocation0]]
  $region42: #{tpu_custom_call.1} parent=0
    _
  %s10 = ssub.s32 1, %s8
  %s11 = scalar_select 0, %s10, %s8
  $region1: #{tpu_custom_call.1} parent=0
    #allocation3 [shape = 'u8[4096]{0}', space=vmem, size = 0x1000, scoped, tag = 'output window, operand 0, single buffered']
    #allocation4 [shape = 's32[1]{0}', space=sflag, size = 0x4, scoped, tag = 'scoped memory for tpu_custom_call.1']
    %12 = vsyncpa [#allocation4], 0
    // Predicated region
    $region2: #{tpu_custom_call.1} parent=1 // pred_check
      _
    $region3: #{tpu_custom_call.1} parent=1 // pred_check_branch
      %14 = sbr.rel (0) target = $region5
    $region4: #{tpu_custom_call.1} parent=1 // pred_region
      _
    $region5: #{tpu_custom_call.1} parent=1 // pred_fallthru
      _
    // Predicated region
    $region6: #{tpu_custom_call.1} parent=1 // pred_check
      _
    $region7: #{tpu_custom_call.1} parent=1 // pred_check_branch
      %16 = sbr.rel (0) target = $region9
    $region8: #{tpu_custom_call.1} parent=1 // pred_region
      _
    $region9: #{tpu_custom_call.1} parent=1 // pred_fallthru
      _
    // Predicated region
    $region10: #{tpu_custom_call.1} parent=1 // pred_check
      _
    $region11: #{tpu_custom_call.1} parent=1 // pred_check_branch
      %18 = sbr.rel (0) target = $region13
    $region12: #{tpu_custom_call.1} parent=1 // pred_region
      _
    $region13: #{tpu_custom_call.1} parent=1 // pred_fallthru
      _
    // Predicated region
    $region14: #{tpu_custom_call.1} parent=1 // pred_check
      _
    $region15: #{tpu_custom_call.1} parent=1 // pred_check_branch
      %20 = sbr.rel (0) target = $region17
    $region16: #{tpu_custom_call.1} parent=1 // pred_region
      _
    $region17: #{tpu_custom_call.1} parent=1 // pred_fallthru
      _
    // Predicated region
    $region18: #{tpu_custom_call.1} parent=1 // pred_check
      _
    $region19: #{tpu_custom_call.1} parent=1 // pred_check_branch
      %22 = sbr.rel (0) target = $region21
    $region20: #{tpu_custom_call.1} parent=1 // pred_region
      _
    $region21: #{tpu_custom_call.1} parent=1 // pred_fallthru
      _
    // Predicated region
    $region22: #{tpu_custom_call.1} parent=1 // pred_check
      _
    $region23: #{tpu_custom_call.1} parent=1 // pred_check_branch
      %24 = sbr.rel (0) target = $region25
    $region24: #{tpu_custom_call.1} parent=1 // pred_region
      _
    $region25: #{tpu_custom_call.1} parent=1 // pred_fallthru
      _
    // Predicated region
    $region26: #{tpu_custom_call.1} parent=1 // pred_check
      _
    $region27: #{tpu_custom_call.1} parent=1 // pred_check_branch
      %26 = sbr.rel (0) target = $region29
    $region28: #{tpu_custom_call.1} parent=1 // pred_region
      _
    $region29: #{tpu_custom_call.1} parent=1 // pred_fallthru
      _
    %v28 = vld [vmem:[%s0] sm:$0xf]
    %v29 = vld [vmem:[%s0 + $0x4] sm:$0xf]
    %v30 = vld [vmem:[%s1] sm:$0xf]
    %v31 = vld [vmem:[%s1 + $0x4] sm:$0xf]
    %v32 = vld [vmem:[%s1 + $0x8] sm:$0xf]
    %v33 = vld [vmem:[%s1 + $0xc] sm:$0xf]
    %v36 = vunpack.c.l.b16 %v28
    %v37 = vunpack.c.l.b16 %v29
    %v38 = vpack.c.b16 %v37, %v36
    %v43 = vunpack.c.l.b16 %v30
    %v44 = vunpack.c.l.b16 %v31
    %v45 = vunpack.c.l.b16 %v32
    %v46 = vunpack.c.l.b16 %v33
    %v47 = vpack.c.b16 %v44, %v43
    %v48 = vpack.c.b16 %v46, %v45
    %vm51 = vcmask 261120
    %v53 = vsel %vm51, %v38, 0
    %55 = vmatprep.subr.bf16.mxu0 0
    %56 = vmatpush1.bf16.msra.mxu0 %v47
    %57 = vmatprep.subr.bf16.mxu0 0
    %58 = vmatpush1.bf16.msra.mxu0 %v48
    %59 = vmatprep.subr.bf16.mxu0 0
    %60 = vmatpush1.bf16.msra.mxu0 0
    %61 = vmatprep.subr.bf16.mxu0 0
    %62 = vmatpush1.bf16.msra.mxu0 0
    %63 = vmatprep.subr.bf16.mxu0 0
    %64 = vmatpush1.bf16.msra.mxu0 0
    %65 = vmatprep.subr.bf16.mxu0 0
    %66 = vmatpush1.bf16.msra.mxu0 0
    %67 = vmatprep.subr.bf16.mxu0 0
    %68 = vmatpush1.bf16.msra.mxu0 0
    %69 = vmatprep.subr.bf16.mxu0 0
    %70 = vmatpush1.bf16.msra.mxu0 0
    %71 = vmatprep.subr.bf16.mxu0 0
    %72 = vmatpush1.bf16.msra.mxu0 0
    %73 = vmatprep.subr.bf16.mxu0 0
    %74 = vmatpush1.bf16.msra.mxu0 0
    %75 = vmatprep.subr.bf16.mxu0 0
    %76 = vmatpush1.bf16.msra.mxu0 0
    %77 = vmatprep.subr.bf16.mxu0 0
    %78 = vmatpush1.bf16.msra.mxu0 0
    %79 = vmatprep.subr.bf16.mxu0 0
    %80 = vmatpush1.bf16.msra.mxu0 0
    %81 = vmatprep.subr.bf16.mxu0 0
    %82 = vmatpush1.bf16.msra.mxu0 0
    %83 = vmatprep.subr.bf16.mxu0 0
    %84 = vmatpush1.bf16.msra.mxu0 0
    %85 = vmatprep.subr.bf16.mxu0 0
    %86 = vmatpush1.bf16.msra.mxu0 0
    %87 = vmatprep.mubr.bf16.mxu0 0
    %88 = vmatmul.mubr.bf16.gmra.mrb[0].mxu0 %v53
    %v89 = vpop.f32.mrb[0].mxu0
    %v90 = vadd.f32 0.0, %v89
    %v91 = vpop.f32.mrb[0].mxu0
    %v92 = vpop.f32.mrb[0].mxu0
    %v93 = vadd.f32 0.0, %v92
    %v94 = vpop.f32.mrb[0].mxu0
    %95 = vdwg.mxu0
    %v96 = vld [vmem:[%s3] sm:$0xff]
    %v97 = vld [vmem:[%s3 + $0x8] sm:$0xff]
    %v98 = vld [vmem:[%s4] sm:$0xff]
    %v99 = vld [vmem:[%s4 + $0x8] sm:$0xff]
    %v100 = vld [vmem:[%s5] sm:$0xff]
    %v101 = vld [vmem:[%s5 + $0x8] sm:$0xff]
    %v102 = vld [vmem:[%s6] sm:$0xff]
    %v103 = vld [vmem:[%s6 + $0x8] sm:$0xff]
    %v104 = vmul.f32 %v90, %v96
    %v105 = vmul.f32 %v93, %v97
    %vm106 = vcmask 1047616
    %107 = vrot.lane.b32.xlu0 %v90, 8
    %v108 = vpop.permute.xlu0 %107
    %v109 = vsel %vm106, %v108, %v90
    %110 = vrot.lane.b32.xlu0 %v93, 8
    %v111 = vpop.permute.xlu0 %110
    %v112 = vsel %vm106, %v111, %v93
    %113 = vrot.lane.b32.xlu0 %v109, 8
    %v114 = vpop.permute.xlu0 %113
    %115 = vrot.lane.b32.xlu0 %v112, 8
    %v116 = vpop.permute.xlu0 %115
    %v117 = vsel %vm106, %v114, %v90
    %v118 = vsel %vm106, %v116, %v93
    %121 = vrot.lane.b32.xlu0 %v98, 4
    %v122 = vpop.permute.xlu0 %121
    %123 = vrot.lane.b32.xlu0 %v99, 4
    %v124 = vpop.permute.xlu0 %123
    %v127 = vmul.f32 %v117, %v122
    %v128 = vmul.f32 %v118, %v124
    %131 = vrot.lane.b32.xlu0 %v127, 124
    %v132 = vpop.permute.xlu0 %131
    %133 = vrot.lane.b32.xlu0 %v128, 124
    %v134 = vpop.permute.xlu0 %133
    %v137 = vadd.f32 %v104, %v132
    %v138 = vadd.f32 %v105, %v134
    %141 = vrot.lane.b32.xlu0 %v100, 32
    %v142 = vpop.permute.xlu0 %141
    %143 = vrot.lane.b32.xlu0 %v101, 32
    %v144 = vpop.permute.xlu0 %143
    %v147 = vmul.f32 %v90, %v142
    %v148 = vmul.f32 %v93, %v144
    %151 = vrot.lane.b32.xlu0 %v90, 96
    %v152 = vpop.permute.xlu0 %151
    %153 = vrot.lane.b32.xlu0 %v93, 96
    %v154 = vpop.permute.xlu0 %153
    %157 = vrot.lane.b32.xlu0 %v152, 8
    %v158 = vpop.permute.xlu0 %157
    %v159 = vsel %vm106, %v158, %v152
    %160 = vrot.lane.b32.xlu0 %v154, 8
    %v161 = vpop.permute.xlu0 %160
    %v162 = vsel %vm106, %v161, %v154
    %163 = vrot.lane.b32.xlu0 %v159, 8
    %v164 = vpop.permute.xlu0 %163
    %165 = vrot.lane.b32.xlu0 %v162, 8
    %v166 = vpop.permute.xlu0 %165
    %v167 = vsel %vm106, %v164, %v152
    %v168 = vsel %vm106, %v166, %v154
    %171 = vrot.lane.b32.xlu0 %v102, 4
    %v172 = vpop.permute.xlu0 %171
    %173 = vrot.lane.b32.xlu0 %v103, 4
    %v174 = vpop.permute.xlu0 %173
    %v177 = vmul.f32 %v167, %v172
    %v178 = vmul.f32 %v168, %v174
    %181 = vrot.lane.b32.xlu0 %v177, 28
    %v182 = vpop.permute.xlu0 %181
    %183 = vrot.lane.b32.xlu0 %v178, 28
    %v184 = vpop.permute.xlu0 %183
    %v187 = vadd.f32 %v147, %v182
    %v188 = vadd.f32 %v148, %v184
    %v189 = vpack.c.bf16 %v138, %v137
    %v190 = vpack.c.bf16 %v188, %v187
    %v191 = vpack.c.bf16 %v93, %v90
    %193 = vrot.lane.b32.xlu0 %v190, 96
    %v194 = vpop.permute.xlu0 %193
    %vm195 = vcmask 64512
    %v197 = vsel %vm195, %v189, 0
    %v200 = vsel %vm195, %v194, 0
    %202 = vmatprep.subr.bf16.mxu0 0
    %203 = vmatpush1.bf16.xpose.msra.mxu0 %v200
    %204 = vmatprep.subr.bf16.mxu0 0
    %205 = vmatpush1.bf16.xpose.msra.mxu0 0
    %206 = vmatprep.subr.bf16.mxu0 0
    %207 = vmatpush1.bf16.xpose.msra.mxu0 0
    %208 = vmatprep.subr.bf16.mxu0 0
    %209 = vmatpush1.bf16.xpose.msra.mxu0 0
    %210 = vmatprep.subr.bf16.mxu0 0
    %211 = vmatpush1.bf16.xpose.msra.mxu0 0
    %212 = vmatprep.subr.bf16.mxu0 0
    %213 = vmatpush1.bf16.xpose.msra.mxu0 0
    %214 = vmatprep.subr.bf16.mxu0 0
    %215 = vmatpush1.bf16.xpose.msra.mxu0 0
    %216 = vmatprep.subr.bf16.mxu0 0
    %217 = vmatpush1.bf16.xpose.msra.mxu0 0
    %218 = vmatprep.subr.bf16.mxu0 0
    %219 = vmatpush1.bf16.xpose.msra.mxu0 0
    %220 = vmatprep.subr.bf16.mxu0 0
    %221 = vmatpush1.bf16.xpose.msra.mxu0 0
    %222 = vmatprep.subr.bf16.mxu0 0
    %223 = vmatpush1.bf16.xpose.msra.mxu0 0
    %224 = vmatprep.subr.bf16.mxu0 0
    %225 = vmatpush1.bf16.xpose.msra.mxu0 0
    %226 = vmatprep.subr.bf16.mxu0 0
    %227 = vmatpush1.bf16.xpose.msra.mxu0 0
    %228 = vmatprep.subr.bf16.mxu0 0
    %229 = vmatpush1.bf16.xpose.msra.mxu0 0
    %230 = vmatprep.subr.bf16.mxu0 0
    %231 = vmatpush1.bf16.xpose.msra.mxu0 0
    %232 = vmatprep.subr.bf16.mxu0 0
    %233 = vmatpush1.bf16.xpose.msra.mxu0 0
    %234 = vmatprep.mubr.bf16.mxu0 0
    %235 = vmatmul.mubr.bf16.gmra.mrb[0].mxu0 %v197
    %v236 = vpop.f32.mrb[0].mxu0
    %v237 = vadd.f32 0.0, %v236
    %v238 = vpop.f32.mrb[0].mxu0
    %v239 = vpop.f32.mrb[0].mxu0
    %v240 = vpop.f32.mrb[0].mxu0
    %241 = vdwg.mxu0
    %v242 = vsel %vm195, %v237, -inf
    %243 = vmax.xlane.f32.xlu0 %v242
    %v244 = vpop.xlane.xlu0 %243
    %v245 = vsub.f32 %v237, %v244
    %v246 = vmul.f32 %v245, 1.442695
    %v247 = vpow.pop %v246
    %v248 = vsel %vm195, %v247, 0.0
    %249 = vadd.xlane.f32.xlu0 %v248
    %v250 = vpop.xlane.xlu0 %249
    %v251 = vpack.c.bf16 %v247, %v247
    %253 = vrot.lane.b32.xlu0 %v191, 64
    %v254 = vpop.permute.xlu0 %253
    %v256 = vsel %vm195, %v251, 0
    %vm258 = vcmask 1043456
    %v260 = vsel %vm258, %v254, 0
    %262 = vmatprep.subr.bf16.mxu0 0
    %263 = vmatpush1.bf16.msra.mxu0 %v260
    %264 = vmatprep.subr.bf16.mxu0 0
    %265 = vmatpush1.bf16.msra.mxu0 0
    %266 = vmatprep.subr.bf16.mxu0 0
    %267 = vmatpush1.bf16.msra.mxu0 0
    %268 = vmatprep.subr.bf16.mxu0 0
    %269 = vmatpush1.bf16.msra.mxu0 0
    %270 = vmatprep.subr.bf16.mxu0 0
    %271 = vmatpush1.bf16.msra.mxu0 0
    %272 = vmatprep.subr.bf16.mxu0 0
    %273 = vmatpush1.bf16.msra.mxu0 0
    %274 = vmatprep.subr.bf16.mxu0 0
    %275 = vmatpush1.bf16.msra.mxu0 0
    %276 = vmatprep.subr.bf16.mxu0 0
    %277 = vmatpush1.bf16.msra.mxu0 0
    %278 = vmatprep.subr.bf16.mxu0 0
    %279 = vmatpush1.bf16.msra.mxu0 0
    %280 = vmatprep.subr.bf16.mxu0 0
    %281 = vmatpush1.bf16.msra.mxu0 0
    %282 = vmatprep.subr.bf16.mxu0 0
    %283 = vmatpush1.bf16.msra.mxu0 0
    %284 = vmatprep.subr.bf16.mxu0 0
    %285 = vmatpush1.bf16.msra.mxu0 0
    %286 = vmatprep.subr.bf16.mxu0 0
    %287 = vmatpush1.bf16.msra.mxu0 0
    %288 = vmatprep.subr.bf16.mxu0 0
    %289 = vmatpush1.bf16.msra.mxu0 0
    %290 = vmatprep.subr.bf16.mxu0 0
    %291 = vmatpush1.bf16.msra.mxu0 0
    %292 = vmatprep.subr.bf16.mxu0 0
    %293 = vmatpush1.bf16.msra.mxu0 0
    %294 = vmatprep.mubr.bf16.mxu0 0
    %295 = vmatmul.mubr.bf16.gmra.mrb[0].mxu0 %v256
    %v296 = vpop.f32.mrb[0].mxu0
    %v297 = vadd.f32 0.0, %v296
    %v298 = vpop.f32.mrb[0].mxu0
    %v299 = vpop.f32.mrb[0].mxu0
    %v300 = vpop.f32.mrb[0].mxu0
    %301 = vdwg.mxu0
    %v302 = vrcp.pop %v250
    %v303 = vmul.f32 %v297, %v302
    %v304 = vpack.c.bf16 %v303, %v303
    %vm305 = vcmask 60416
    %306 = vst.msk [vmem:[#allocation2] sm:$0xf] %vm305, %v304
    %v308 = vrot.slane %v189, 4
    %v309 = vrot.slane %v190, 4
    %310 = vrot.lane.b32.xlu0 %v309, 96
    %v311 = vpop.permute.xlu0 %310
    %v313 = vsel %vm195, %v308, 0
    %v316 = vsel %vm195, %v311, 0
    %318 = vmatprep.subr.bf16.mxu0 0
    %319 = vmatpush1.bf16.xpose.msra.mxu0 %v316
    %320 = vmatprep.subr.bf16.mxu0 0
    %321 = vmatpush1.bf16.xpose.msra.mxu0 0
    %322 = vmatprep.subr.bf16.mxu0 0
    %323 = vmatpush1.bf16.xpose.msra.mxu0 0
    %324 = vmatprep.subr.bf16.mxu0 0
    %325 = vmatpush1.bf16.xpose.msra.mxu0 0
    %326 = vmatprep.subr.bf16.mxu0 0
    %327 = vmatpush1.bf16.xpose.msra.mxu0 0
    %328 = vmatprep.subr.bf16.mxu0 0
    %329 = vmatpush1.bf16.xpose.msra.mxu0 0
    %330 = vmatprep.subr.bf16.mxu0 0
    %331 = vmatpush1.bf16.xpose.msra.mxu0 0
    %332 = vmatprep.subr.bf16.mxu0 0
    %333 = vmatpush1.bf16.xpose.msra.mxu0 0
    %334 = vmatprep.subr.bf16.mxu0 0
    %335 = vmatpush1.bf16.xpose.msra.mxu0 0
    %336 = vmatprep.subr.bf16.mxu0 0
    %337 = vmatpush1.bf16.xpose.msra.mxu0 0
    %338 = vmatprep.subr.bf16.mxu0 0
    %339 = vmatpush1.bf16.xpose.msra.mxu0 0
    %340 = vmatprep.subr.bf16.mxu0 0
    %341 = vmatpush1.bf16.xpose.msra.mxu0 0
    %342 = vmatprep.subr.bf16.mxu0 0
    %343 = vmatpush1.bf16.xpose.msra.mxu0 0
    %344 = vmatprep.subr.bf16.mxu0 0
    %345 = vmatpush1.bf16.xpose.msra.mxu0 0
    %346 = vmatprep.subr.bf16.mxu0 0
    %347 = vmatpush1.bf16.xpose.msra.mxu0 0
    %348 = vmatprep.subr.bf16.mxu0 0
    %349 = vmatpush1.bf16.xpose.msra.mxu0 0
    %350 = vmatprep.mubr.bf16.mxu0 0
    %351 = vmatmul.mubr.bf16.gmra.mrb[0].mxu0 %v313
    %v352 = vpop.f32.mrb[0].mxu0
    %v353 = vadd.f32 0.0, %v352
    %v354 = vpop.f32.mrb[0].mxu0
    %v355 = vpop.f32.mrb[0].mxu0
    %v356 = vpop.f32.mrb[0].mxu0
    %357 = vdwg.mxu0
    %v358 = vsel %vm195, %v353, -inf
    %359 = vmax.xlane.f32.xlu0 %v358
    %v360 = vpop.xlane.xlu0 %359
    %v361 = vsub.f32 %v353, %v360
    %v362 = vmul.f32 %v361, 1.442695
    %v363 = vpow.pop %v362
    %v364 = vsel %vm195, %v363, 0.0
    %365 = vadd.xlane.f32.xlu0 %v364
    %v366 = vpop.xlane.xlu0 %365
    %v367 = vpack.c.bf16 %v363, %v363
    %v368 = vrot.slane %v191, 4
    %369 = vrot.lane.b32.xlu0 %v368, 64
    %v370 = vpop.permute.xlu0 %369
    %v372 = vsel %vm195, %v367, 0
    %v375 = vsel %vm258, %v370, 0
    %377 = vmatprep.subr.bf16.mxu0 0
    %378 = vmatpush1.bf16.msra.mxu0 %v375
    %379 = vmatprep.subr.bf16.mxu0 0
    %380 = vmatpush1.bf16.msra.mxu0 0
    %381 = vmatprep.subr.bf16.mxu0 0
    %382 = vmatpush1.bf16.msra.mxu0 0
    %383 = vmatprep.subr.bf16.mxu0 0
    %384 = vmatpush1.bf16.msra.mxu0 0
    %385 = vmatprep.subr.bf16.mxu0 0
    %386 = vmatpush1.bf16.msra.mxu0 0
    %387 = vmatprep.subr.bf16.mxu0 0
    %388 = vmatpush1.bf16.msra.mxu0 0
    %389 = vmatprep.subr.bf16.mxu0 0
    %390 = vmatpush1.bf16.msra.mxu0 0
    %391 = vmatprep.subr.bf16.mxu0 0
    %392 = vmatpush1.bf16.msra.mxu0 0
    %393 = vmatprep.subr.bf16.mxu0 0
    %394 = vmatpush1.bf16.msra.mxu0 0
    %395 = vmatprep.subr.bf16.mxu0 0
    %396 = vmatpush1.bf16.msra.mxu0 0
    %397 = vmatprep.subr.bf16.mxu0 0
    %398 = vmatpush1.bf16.msra.mxu0 0
    %399 = vmatprep.subr.bf16.mxu0 0
    %400 = vmatpush1.bf16.msra.mxu0 0
    %401 = vmatprep.subr.bf16.mxu0 0
    %402 = vmatpush1.bf16.msra.mxu0 0
    %403 = vmatprep.subr.bf16.mxu0 0
    %404 = vmatpush1.bf16.msra.mxu0 0
    %405 = vmatprep.subr.bf16.mxu0 0
    %406 = vmatpush1.bf16.msra.mxu0 0
    %407 = vmatprep.subr.bf16.mxu0 0
    %408 = vmatpush1.bf16.msra.mxu0 0
    %409 = vmatprep.mubr.bf16.mxu0 0
    %410 = vmatmul.mubr.bf16.gmra.mrb[0].mxu0 %v372
    %v411 = vpop.f32.mrb[0].mxu0
    %v412 = vadd.f32 0.0, %v411
    %v413 = vpop.f32.mrb[0].mxu0
    %v414 = vpop.f32.mrb[0].mxu0
    %v415 = vpop.f32.mrb[0].mxu0
    %416 = vdwg.mxu0
    %v417 = vrcp.pop %v366
    %v418 = vmul.f32 %v412, %v417
    %v419 = vpack.c.bf16 %v418, %v418
    %v421 = vrot.slane %v419, 4
    %vm423 = vcmask 64516
    %424 = vst.msk [vmem:[#allocation2] sm:$0xf0] %vm423, %v421
    %427 = vrot.lane.b32.xlu0 %v96, 8
    %v428 = vpop.permute.xlu0 %427
    %429 = vrot.lane.b32.xlu0 %v97, 8
    %v430 = vpop.permute.xlu0 %429
    %v433 = vmul.f32 %v90, %v428
    %v434 = vmul.f32 %v93, %v430
    %435 = vrot.lane.b32.xlu0 %v90, 120
    %v436 = vpop.permute.xlu0 %435
    %437 = vrot.lane.b32.xlu0 %v93, 120
    %v438 = vpop.permute.xlu0 %437
    %441 = vrot.lane.b32.xlu0 %v436, 8
    %v442 = vpop.permute.xlu0 %441
    %v443 = vsel %vm106, %v442, %v436
    %444 = vrot.lane.b32.xlu0 %v438, 8
    %v445 = vpop.permute.xlu0 %444
    %v446 = vsel %vm106, %v445, %v438
    %447 = vrot.lane.b32.xlu0 %v443, 8
    %v448 = vpop.permute.xlu0 %447
    %449 = vrot.lane.b32.xlu0 %v446, 8
    %v450 = vpop.permute.xlu0 %449
    %v451 = vsel %vm106, %v448, %v436
    %v452 = vsel %vm106, %v450, %v438
    %v453 = vmul.f32 %v451, %v122
    %v454 = vmul.f32 %v452, %v124
    %457 = vrot.lane.b32.xlu0 %v453, 4
    %v458 = vpop.permute.xlu0 %457
    %459 = vrot.lane.b32.xlu0 %v454, 4
    %v460 = vpop.permute.xlu0 %459
    %v463 = vadd.f32 %v433, %v458
    %v464 = vadd.f32 %v434, %v460
    %465 = vrot.lane.b32.xlu0 %v100, 40
    %v466 = vpop.permute.xlu0 %465
    %467 = vrot.lane.b32.xlu0 %v101, 40
    %v468 = vpop.permute.xlu0 %467
    %v471 = vmul.f32 %v90, %v466
    %v472 = vmul.f32 %v93, %v468
    %473 = vrot.lane.b32.xlu0 %v90, 88
    %v474 = vpop.permute.xlu0 %473
    %475 = vrot.lane.b32.xlu0 %v93, 88
    %v476 = vpop.permute.xlu0 %475
    %479 = vrot.lane.b32.xlu0 %v474, 8
    %v480 = vpop.permute.xlu0 %479
    %v481 = vsel %vm106, %v480, %v474
    %482 = vrot.lane.b32.xlu0 %v476, 8
    %v483 = vpop.permute.xlu0 %482
    %v484 = vsel %vm106, %v483, %v476
    %485 = vrot.lane.b32.xlu0 %v481, 8
    %v486 = vpop.permute.xlu0 %485
    %487 = vrot.lane.b32.xlu0 %v484, 8
    %v488 = vpop.permute.xlu0 %487
    %v489 = vsel %vm106, %v486, %v474
    %v490 = vsel %vm106, %v488, %v476
    %v491 = vmul.f32 %v489, %v172
    %v492 = vmul.f32 %v490, %v174
    %495 = vrot.lane.b32.xlu0 %v491, 36
    %v496 = vpop.permute.xlu0 %495
    %497 = vrot.lane.b32.xlu0 %v492, 36
    %v498 = vpop.permute.xlu0 %497
    %v501 = vadd.f32 %v471, %v496
    %v502 = vadd.f32 %v472, %v498
    %v503 = vpack.c.bf16 %v464, %v463
    %v504 = vpack.c.bf16 %v502, %v501
    %506 = vrot.lane.b32.xlu0 %v503, 120
    %v507 = vpop.permute.xlu0 %506
    %509 = vrot.lane.b32.xlu0 %v504, 88
    %v510 = vpop.permute.xlu0 %509
    %v512 = vsel %vm195, %v507, 0
    %v515 = vsel %vm195, %v510, 0
    %517 = vmatprep.subr.bf16.mxu0 0
    %518 = vmatpush1.bf16.xpose.msra.mxu0 %v515
    %519 = vmatprep.subr.bf16.mxu0 0
    %520 = vmatpush1.bf16.xpose.msra.mxu0 0
    %521 = vmatprep.subr.bf16.mxu0 0
    %522 = vmatpush1.bf16.xpose.msra.mxu0 0
    %523 = vmatprep.subr.bf16.mxu0 0
    %524 = vmatpush1.bf16.xpose.msra.mxu0 0
    %525 = vmatprep.subr.bf16.mxu0 0
    %526 = vmatpush1.bf16.xpose.msra.mxu0 0
    %527 = vmatprep.subr.bf16.mxu0 0
    %528 = vmatpush1.bf16.xpose.msra.mxu0 0
    %529 = vmatprep.subr.bf16.mxu0 0
    %530 = vmatpush1.bf16.xpose.msra.mxu0 0
    %531 = vmatprep.subr.bf16.mxu0 0
    %532 = vmatpush1.bf16.xpose.msra.mxu0 0
    %533 = vmatprep.subr.bf16.mxu0 0
    %534 = vmatpush1.bf16.xpose.msra.mxu0 0
    %535 = vmatprep.subr.bf16.mxu0 0
    %536 = vmatpush1.bf16.xpose.msra.mxu0 0
    %537 = vmatprep.subr.bf16.mxu0 0
    %538 = vmatpush1.bf16.xpose.msra.mxu0 0
    %539 = vmatprep.subr.bf16.mxu0 0
    %540 = vmatpush1.bf16.xpose.msra.mxu0 0
    %541 = vmatprep.subr.bf16.mxu0 0
    %542 = vmatpush1.bf16.xpose.msra.mxu0 0
    %543 = vmatprep.subr.bf16.mxu0 0
    %544 = vmatpush1.bf16.xpose.msra.mxu0 0
    %545 = vmatprep.subr.bf16.mxu0 0
    %546 = vmatpush1.bf16.xpose.msra.mxu0 0
    %547 = vmatprep.subr.bf16.mxu0 0
    %548 = vmatpush1.bf16.xpose.msra.mxu0 0
    %549 = vmatprep.mubr.bf16.mxu0 0
    %550 = vmatmul.mubr.bf16.gmra.mrb[0].mxu0 %v512
    %v551 = vpop.f32.mrb[0].mxu0
    %v552 = vadd.f32 0.0, %v551
    %v553 = vpop.f32.mrb[0].mxu0
    %v554 = vpop.f32.mrb[0].mxu0
    %v555 = vpop.f32.mrb[0].mxu0
    %556 = vdwg.mxu0
    %v557 = vsel %vm195, %v552, -inf
    %558 = vmax.xlane.f32.xlu0 %v557
    %v559 = vpop.xlane.xlu0 %558
    %v560 = vsub.f32 %v552, %v559
    %v561 = vmul.f32 %v560, 1.442695
    %v562 = vpow.pop %v561
    %v563 = vsel %vm195, %v562, 0.0
    %564 = vadd.xlane.f32.xlu0 %v563
    %v565 = vpop.xlane.xlu0 %564
    %v566 = vpack.c.bf16 %v562, %v562
    %567 = vrot.lane.b32.xlu0 %v191, 56
    %v568 = vpop.permute.xlu0 %567
    %v570 = vsel %vm195, %v566, 0
    %v573 = vsel %vm258, %v568, 0
    %575 = vmatprep.subr.bf16.mxu0 0
    %576 = vmatpush1.bf16.msra.mxu0 %v573
    %577 = vmatprep.subr.bf16.mxu0 0
    %578 = vmatpush1.bf16.msra.mxu0 0
    %579 = vmatprep.subr.bf16.mxu0 0
    %580 = vmatpush1.bf16.msra.mxu0 0
    %581 = vmatprep.subr.bf16.mxu0 0
    %582 = vmatpush1.bf16.msra.mxu0 0
    %583 = vmatprep.subr.bf16.mxu0 0
    %584 = vmatpush1.bf16.msra.mxu0 0
    %585 = vmatprep.subr.bf16.mxu0 0
    %586 = vmatpush1.bf16.msra.mxu0 0
    %587 = vmatprep.subr.bf16.mxu0 0
    %588 = vmatpush1.bf16.msra.mxu0 0
    %589 = vmatprep.subr.bf16.mxu0 0
    %590 = vmatpush1.bf16.msra.mxu0 0
    %591 = vmatprep.subr.bf16.mxu0 0
    %592 = vmatpush1.bf16.msra.mxu0 0
    %593 = vmatprep.subr.bf16.mxu0 0
    %594 = vmatpush1.bf16.msra.mxu0 0
    %595 = vmatprep.subr.bf16.mxu0 0
    %596 = vmatpush1.bf16.msra.mxu0 0
    %597 = vmatprep.subr.bf16.mxu0 0
    %598 = vmatpush1.bf16.msra.mxu0 0
    %599 = vmatprep.subr.bf16.mxu0 0
    %600 = vmatpush1.bf16.msra.mxu0 0
    %601 = vmatprep.subr.bf16.mxu0 0
    %602 = vmatpush1.bf16.msra.mxu0 0
    %603 = vmatprep.subr.bf16.mxu0 0
    %604 = vmatpush1.bf16.msra.mxu0 0
    %605 = vmatprep.subr.bf16.mxu0 0
    %606 = vmatpush1.bf16.msra.mxu0 0
    %607 = vmatprep.mubr.bf16.mxu0 0
    %608 = vmatmul.mubr.bf16.gmra.mrb[0].mxu0 %v570
    %v609 = vpop.f32.mrb[0].mxu0
    %v610 = vadd.f32 0.0, %v609
    %v611 = vpop.f32.mrb[0].mxu0
    %v612 = vpop.f32.mrb[0].mxu0
    %v613 = vpop.f32.mrb[0].mxu0
    %614 = vdwg.mxu0
    %v615 = vrcp.pop %v565
    %v616 = vmul.f32 %v610, %v615
    %v617 = vpack.c.bf16 %v616, %v616
    %619 = vrot.lane.b32.xlu0 %v617, 8
    %v620 = vpop.permute.xlu0 %619
    %vm622 = vcmask 126016
    %623 = vst.msk [vmem:[#allocation2] sm:$0xf] %vm622, %v620
    %v624 = vrot.slane %v503, 4
    %625 = vrot.lane.b32.xlu0 %v624, 120
    %v626 = vpop.permute.xlu0 %625
    %v627 = vrot.slane %v504, 4
    %628 = vrot.lane.b32.xlu0 %v627, 88
    %v629 = vpop.permute.xlu0 %628
    %v631 = vsel %vm195, %v626, 0
    %v634 = vsel %vm195, %v629, 0
    %636 = vmatprep.subr.bf16.mxu0 0
    %637 = vmatpush1.bf16.xpose.msra.mxu0 %v634
    %638 = vmatprep.subr.bf16.mxu0 0
    %639 = vmatpush1.bf16.xpose.msra.mxu0 0
    %640 = vmatprep.subr.bf16.mxu0 0
    %641 = vmatpush1.bf16.xpose.msra.mxu0 0
    %642 = vmatprep.subr.bf16.mxu0 0
    %643 = vmatpush1.bf16.xpose.msra.mxu0 0
    %644 = vmatprep.subr.bf16.mxu0 0
    %645 = vmatpush1.bf16.xpose.msra.mxu0 0
    %646 = vmatprep.subr.bf16.mxu0 0
    %647 = vmatpush1.bf16.xpose.msra.mxu0 0
    %648 = vmatprep.subr.bf16.mxu0 0
    %649 = vmatpush1.bf16.xpose.msra.mxu0 0
    %650 = vmatprep.subr.bf16.mxu0 0
    %651 = vmatpush1.bf16.xpose.msra.mxu0 0
    %652 = vmatprep.subr.bf16.mxu0 0
    %653 = vmatpush1.bf16.xpose.msra.mxu0 0
    %654 = vmatprep.subr.bf16.mxu0 0
    %655 = vmatpush1.bf16.xpose.msra.mxu0 0
    %656 = vmatprep.subr.bf16.mxu0 0
    %657 = vmatpush1.bf16.xpose.msra.mxu0 0
    %658 = vmatprep.subr.bf16.mxu0 0
    %659 = vmatpush1.bf16.xpose.msra.mxu0 0
    %660 = vmatprep.subr.bf16.mxu0 0
    %661 = vmatpush1.bf16.xpose.msra.mxu0 0
    %662 = vmatprep.subr.bf16.mxu0 0
    %663 = vmatpush1.bf16.xpose.msra.mxu0 0
    %664 = vmatprep.subr.bf16.mxu0 0
    %665 = vmatpush1.bf16.xpose.msra.mxu0 0
    %666 = vmatprep.subr.bf16.mxu0 0
    %667 = vmatpush1.bf16.xpose.msra.mxu0 0
    %668 = vmatprep.mubr.bf16.mxu0 0
    %669 = vmatmul.mubr.bf16.gmra.mrb[0].mxu0 %v631
    %v670 = vpop.f32.mrb[0].mxu0
    %v671 = vadd.f32 0.0, %v670
    %v672 = vpop.f32.mrb[0].mxu0
    %v673 = vpop.f32.mrb[0].mxu0
    %v674 = vpop.f32.mrb[0].mxu0
    %675 = vdwg.mxu0
    %v676 = vsel %vm195, %v671, -inf
    %677 = vmax.xlane.f32.xlu0 %v676
    %v678 = vpop.xlane.xlu0 %677
    %v679 = vsub.f32 %v671, %v678
    %v680 = vmul.f32 %v679, 1.442695
    %v681 = vpow.pop %v680
    %v682 = vsel %vm195, %v681, 0.0
    %683 = vadd.xlane.f32.xlu0 %v682
    %v684 = vpop.xlane.xlu0 %683
    %v685 = vpack.c.bf16 %v681, %v681
    %686 = vrot.lane.b32.xlu0 %v368, 56
    %v687 = vpop.permute.xlu0 %686
    %v689 = vsel %vm195, %v685, 0
    %v692 = vsel %vm258, %v687, 0
    %694 = vmatprep.subr.bf16.mxu0 0
    %695 = vmatpush1.bf16.msra.mxu0 %v692
    %696 = vmatprep.subr.bf16.mxu0 0
    %697 = vmatpush1.bf16.msra.mxu0 0
    %698 = vmatprep.subr.bf16.mxu0 0
    %699 = vmatpush1.bf16.msra.mxu0 0
    %700 = vmatprep.subr.bf16.mxu0 0
    %701 = vmatpush1.bf16.msra.mxu0 0
    %702 = vmatprep.subr.bf16.mxu0 0
    %703 = vmatpush1.bf16.msra.mxu0 0
    %704 = vmatprep.subr.bf16.mxu0 0
    %705 = vmatpush1.bf16.msra.mxu0 0
    %706 = vmatprep.subr.bf16.mxu0 0
    %707 = vmatpush1.bf16.msra.mxu0 0
    %708 = vmatprep.subr.bf16.mxu0 0
    %709 = vmatpush1.bf16.msra.mxu0 0
    %710 = vmatprep.subr.bf16.mxu0 0
    %711 = vmatpush1.bf16.msra.mxu0 0
    %712 = vmatprep.subr.bf16.mxu0 0
    %713 = vmatpush1.bf16.msra.mxu0 0
    %714 = vmatprep.subr.bf16.mxu0 0
    %715 = vmatpush1.bf16.msra.mxu0 0
    %716 = vmatprep.subr.bf16.mxu0 0
    %717 = vmatpush1.bf16.msra.mxu0 0
    %718 = vmatprep.subr.bf16.mxu0 0
    %719 = vmatpush1.bf16.msra.mxu0 0
    %720 = vmatprep.subr.bf16.mxu0 0
    %721 = vmatpush1.bf16.msra.mxu0 0
    %722 = vmatprep.subr.bf16.mxu0 0
    %723 = vmatpush1.bf16.msra.mxu0 0
    %724 = vmatprep.subr.bf16.mxu0 0
    %725 = vmatpush1.bf16.msra.mxu0 0
    %726 = vmatprep.mubr.bf16.mxu0 0
    %727 = vmatmul.mubr.bf16.gmra.mrb[0].mxu0 %v689
    %v728 = vpop.f32.mrb[0].mxu0
    %v729 = vadd.f32 0.0, %v728
    %v730 = vpop.f32.mrb[0].mxu0
    %v731 = vpop.f32.mrb[0].mxu0
    %v732 = vpop.f32.mrb[0].mxu0
    %733 = vdwg.mxu0
    %v734 = vrcp.pop %v684
    %v735 = vmul.f32 %v729, %v734
    %v736 = vpack.c.bf16 %v735, %v735
    %v738 = vrot.slane %v736, 4
    %739 = vrot.lane.b32.xlu0 %v738, 8
    %v740 = vpop.permute.xlu0 %739
    %vm742 = vcmask 130116
    %743 = vst.msk [vmem:[#allocation2] sm:$0xf0] %vm742, %v740
    %744 = vrot.lane.b32.xlu0 %v96, 16
    %v745 = vpop.permute.xlu0 %744
    %746 = vrot.lane.b32.xlu0 %v97, 16
    %v747 = vpop.permute.xlu0 %746
    %v750 = vmul.f32 %v90, %v745
    %v751 = vmul.f32 %v93, %v747
    %752 = vrot.lane.b32.xlu0 %v90, 112
    %v753 = vpop.permute.xlu0 %752
    %754 = vrot.lane.b32.xlu0 %v93, 112
    %v755 = vpop.permute.xlu0 %754
    %758 = vrot.lane.b32.xlu0 %v753, 8
    %v759 = vpop.permute.xlu0 %758
    %v760 = vsel %vm106, %v759, %v753
    %761 = vrot.lane.b32.xlu0 %v755, 8
    %v762 = vpop.permute.xlu0 %761
    %v763 = vsel %vm106, %v762, %v755
    %764 = vrot.lane.b32.xlu0 %v760, 8
    %v765 = vpop.permute.xlu0 %764
    %766 = vrot.lane.b32.xlu0 %v763, 8
    %v767 = vpop.permute.xlu0 %766
    %v768 = vsel %vm106, %v765, %v753
    %v769 = vsel %vm106, %v767, %v755
    %v770 = vmul.f32 %v768, %v122
    %v771 = vmul.f32 %v769, %v124
    %774 = vrot.lane.b32.xlu0 %v770, 12
    %v775 = vpop.permute.xlu0 %774
    %776 = vrot.lane.b32.xlu0 %v771, 12
    %v777 = vpop.permute.xlu0 %776
    %v780 = vadd.f32 %v750, %v775
    %v781 = vadd.f32 %v751, %v777
    %782 = vrot.lane.b32.xlu0 %v100, 48
    %v783 = vpop.permute.xlu0 %782
    %784 = vrot.lane.b32.xlu0 %v101, 48
    %v785 = vpop.permute.xlu0 %784
    %v788 = vmul.f32 %v90, %v783
    %v789 = vmul.f32 %v93, %v785
    %790 = vrot.lane.b32.xlu0 %v90, 80
    %v791 = vpop.permute.xlu0 %790
    %792 = vrot.lane.b32.xlu0 %v93, 80
    %v793 = vpop.permute.xlu0 %792
    %796 = vrot.lane.b32.xlu0 %v791, 8
    %v797 = vpop.permute.xlu0 %796
    %v798 = vsel %vm106, %v797, %v791
    %799 = vrot.lane.b32.xlu0 %v793, 8
    %v800 = vpop.permute.xlu0 %799
    %v801 = vsel %vm106, %v800, %v793
    %802 = vrot.lane.b32.xlu0 %v798, 8
    %v803 = vpop.permute.xlu0 %802
    %804 = vrot.lane.b32.xlu0 %v801, 8
    %v805 = vpop.permute.xlu0 %804
    %v806 = vsel %vm106, %v803, %v791
    %v807 = vsel %vm106, %v805, %v793
    %v808 = vmul.f32 %v806, %v172
    %v809 = vmul.f32 %v807, %v174
    %812 = vrot.lane.b32.xlu0 %v808, 44
    %v813 = vpop.permute.xlu0 %812
    %814 = vrot.lane.b32.xlu0 %v809, 44
    %v815 = vpop.permute.xlu0 %814
    %v818 = vadd.f32 %v788, %v813
    %v819 = vadd.f32 %v789, %v815
    %v820 = vpack.c.bf16 %v781, %v780
    %v821 = vpack.c.bf16 %v819, %v818
    %823 = vrot.lane.b32.xlu0 %v820, 112
    %v824 = vpop.permute.xlu0 %823
    %826 = vrot.lane.b32.xlu0 %v821, 80
    %v827 = vpop.permute.xlu0 %826
    %v829 = vsel %vm195, %v824, 0
    %v832 = vsel %vm195, %v827, 0
    %834 = vmatprep.subr.bf16.mxu0 0
    %835 = vmatpush1.bf16.xpose.msra.mxu0 %v832
    %836 = vmatprep.subr.bf16.mxu0 0
    %837 = vmatpush1.bf16.xpose.msra.mxu0 0
    %838 = vmatprep.subr.bf16.mxu0 0
    %839 = vmatpush1.bf16.xpose.msra.mxu0 0
    %840 = vmatprep.subr.bf16.mxu0 0
    %841 = vmatpush1.bf16.xpose.msra.mxu0 0
    %842 = vmatprep.subr.bf16.mxu0 0
    %843 = vmatpush1.bf16.xpose.msra.mxu0 0
    %844 = vmatprep.subr.bf16.mxu0 0
    %845 = vmatpush1.bf16.xpose.msra.mxu0 0
    %846 = vmatprep.subr.bf16.mxu0 0
    %847 = vmatpush1.bf16.xpose.msra.mxu0 0
    %848 = vmatprep.subr.bf16.mxu0 0
    %849 = vmatpush1.bf16.xpose.msra.mxu0 0
    %850 = vmatprep.subr.bf16.mxu0 0
    %851 = vmatpush1.bf16.xpose.msra.mxu0 0
    %852 = vmatprep.subr.bf16.mxu0 0
    %853 = vmatpush1.bf16.xpose.msra.mxu0 0
    %854 = vmatprep.subr.bf16.mxu0 0
    %855 = vmatpush1.bf16.xpose.msra.mxu0 0
    %856 = vmatprep.subr.bf16.mxu0 0
    %857 = vmatpush1.bf16.xpose.msra.mxu0 0
    %858 = vmatprep.subr.bf16.mxu0 0
    %859 = vmatpush1.bf16.xpose.msra.mxu0 0
    %860 = vmatprep.subr.bf16.mxu0 0
    %861 = vmatpush1.bf16.xpose.msra.mxu0 0
    %862 = vmatprep.subr.bf16.mxu0 0
    %863 = vmatpush1.bf16.xpose.msra.mxu0 0
    %864 = vmatprep.subr.bf16.mxu0 0
    %865 = vmatpush1.bf16.xpose.msra.mxu0 0
    %866 = vmatprep.mubr.bf16.mxu0 0
    %867 = vmatmul.mubr.bf16.gmra.mrb[0].mxu0 %v829
    %v868 = vpop.f32.mrb[0].mxu0
    %v869 = vadd.f32 0.0, %v868
    %v870 = vpop.f32.mrb[0].mxu0
    %v871 = vpop.f32.mrb[0].mxu0
    %v872 = vpop.f32.mrb[0].mxu0
    %873 = vdwg.mxu0
    %v874 = vsel %vm195, %v869, -inf
    %875 = vmax.xlane.f32.xlu0 %v874
    %v876 = vpop.xlane.xlu0 %875
    %v877 = vsub.f32 %v869, %v876
    %v878 = vmul.f32 %v877, 1.442695
    %v879 = vpow.pop %v878
    %v880 = vsel %vm195, %v879, 0.0
    %881 = vadd.xlane.f32.xlu0 %v880
    %v882 = vpop.xlane.xlu0 %881
    %v883 = vpack.c.bf16 %v879, %v879
    %884 = vrot.lane.b32.xlu0 %v191, 48
    %v885 = vpop.permute.xlu0 %884
    %v887 = vsel %vm195, %v883, 0
    %v890 = vsel %vm258, %v885, 0
    %892 = vmatprep.subr.bf16.mxu0 0
    %893 = vmatpush1.bf16.msra.mxu0 %v890
    %894 = vmatprep.subr.bf16.mxu0 0
    %895 = vmatpush1.bf16.msra.mxu0 0
    %896 = vmatprep.subr.bf16.mxu0 0
    %897 = vmatpush1.bf16.msra.mxu0 0
    %898 = vmatprep.subr.bf16.mxu0 0
    %899 = vmatpush1.bf16.msra.mxu0 0
    %900 = vmatprep.subr.bf16.mxu0 0
    %901 = vmatpush1.bf16.msra.mxu0 0
    %902 = vmatprep.subr.bf16.mxu0 0
    %903 = vmatpush1.bf16.msra.mxu0 0
    %904 = vmatprep.subr.bf16.mxu0 0
    %905 = vmatpush1.bf16.msra.mxu0 0
    %906 = vmatprep.subr.bf16.mxu0 0
    %907 = vmatpush1.bf16.msra.mxu0 0
    %908 = vmatprep.subr.bf16.mxu0 0
    %909 = vmatpush1.bf16.msra.mxu0 0
    %910 = vmatprep.subr.bf16.mxu0 0
    %911 = vmatpush1.bf16.msra.mxu0 0
    %912 = vmatprep.subr.bf16.mxu0 0
    %913 = vmatpush1.bf16.msra.mxu0 0
    %914 = vmatprep.subr.bf16.mxu0 0
    %915 = vmatpush1.bf16.msra.mxu0 0
    %916 = vmatprep.subr.bf16.mxu0 0
    %917 = vmatpush1.bf16.msra.mxu0 0
    %918 = vmatprep.subr.bf16.mxu0 0
    %919 = vmatpush1.bf16.msra.mxu0 0
    %920 = vmatprep.subr.bf16.mxu0 0
    %921 = vmatpush1.bf16.msra.mxu0 0
    %922 = vmatprep.subr.bf16.mxu0 0
    %923 = vmatpush1.bf16.msra.mxu0 0
    %924 = vmatprep.mubr.bf16.mxu0 0
    %925 = vmatmul.mubr.bf16.gmra.mrb[0].mxu0 %v887
    %v926 = vpop.f32.mrb[0].mxu0
    %v927 = vadd.f32 0.0, %v926
    %v928 = vpop.f32.mrb[0].mxu0
    %v929 = vpop.f32.mrb[0].mxu0
    %v930 = vpop.f32.mrb[0].mxu0
    %931 = vdwg.mxu0
    %v932 = vrcp.pop %v882
    %v933 = vmul.f32 %v927, %v932
    %v934 = vpack.c.bf16 %v933, %v933
    %936 = vrot.lane.b32.xlu0 %v934, 16
    %v937 = vpop.permute.xlu0 %936
    %vm939 = vcmask 191616
    %940 = vst.msk [vmem:[#allocation2] sm:$0xf] %vm939, %v937
    %v941 = vrot.slane %v820, 4
    %942 = vrot.lane.b32.xlu0 %v941, 112
    %v943 = vpop.permute.xlu0 %942
    %v944 = vrot.slane %v821, 4
    %945 = vrot.lane.b32.xlu0 %v944, 80
    %v946 = vpop.permute.xlu0 %945
    %v948 = vsel %vm195, %v943, 0
    %v951 = vsel %vm195, %v946, 0
    %953 = vmatprep.subr.bf16.mxu0 0
    %954 = vmatpush1.bf16.xpose.msra.mxu0 %v951
    %955 = vmatprep.subr.bf16.mxu0 0
    %956 = vmatpush1.bf16.xpose.msra.mxu0 0
    %957 = vmatprep.subr.bf16.mxu0 0
    %958 = vmatpush1.bf16.xpose.msra.mxu0 0
    %959 = vmatprep.subr.bf16.mxu0 0
    %960 = vmatpush1.bf16.xpose.msra.mxu0 0
    %961 = vmatprep.subr.bf16.mxu0 0
    %962 = vmatpush1.bf16.xpose.msra.mxu0 0
    %963 = vmatprep.subr.bf16.mxu0 0
    %964 = vmatpush1.bf16.xpose.msra.mxu0 0
    %965 = vmatprep.subr.bf16.mxu0 0
    %966 = vmatpush1.bf16.xpose.msra.mxu0 0
    %967 = vmatprep.subr.bf16.mxu0 0
    %968 = vmatpush1.bf16.xpose.msra.mxu0 0
    %969 = vmatprep.subr.bf16.mxu0 0
    %970 = vmatpush1.bf16.xpose.msra.mxu0 0
    %971 = vmatprep.subr.bf16.mxu0 0
    %972 = vmatpush1.bf16.xpose.msra.mxu0 0
    %973 = vmatprep.subr.bf16.mxu0 0
    %974 = vmatpush1.bf16.xpose.msra.mxu0 0
    %975 = vmatprep.subr.bf16.mxu0 0
    %976 = vmatpush1.bf16.xpose.msra.mxu0 0
    %977 = vmatprep.subr.bf16.mxu0 0
    %978 = vmatpush1.bf16.xpose.msra.mxu0 0
    %979 = vmatprep.subr.bf16.mxu0 0
    %980 = vmatpush1.bf16.xpose.msra.mxu0 0
    %981 = vmatprep.subr.bf16.mxu0 0
    %982 = vmatpush1.bf16.xpose.msra.mxu0 0
    %983 = vmatprep.subr.bf16.mxu0 0
    %984 = vmatpush1.bf16.xpose.msra.mxu0 0
    %985 = vmatprep.mubr.bf16.mxu0 0
    %986 = vmatmul.mubr.bf16.gmra.mrb[0].mxu0 %v948
    %v987 = vpop.f32.mrb[0].mxu0
    %v988 = vadd.f32 0.0, %v987
    %v989 = vpop.f32.mrb[0].mxu0
    %v990 = vpop.f32.mrb[0].mxu0
    %v991 = vpop.f32.mrb[0].mxu0
    %992 = vdwg.mxu0
    %v993 = vsel %vm195, %v988, -inf
    %994 = vmax.xlane.f32.xlu0 %v993
    %v995 = vpop.xlane.xlu0 %994
    %v996 = vsub.f32 %v988, %v995
    %v997 = vmul.f32 %v996, 1.442695
    %v998 = vpow.pop %v997
    %v999 = vsel %vm195, %v998, 0.0
    %1000 = vadd.xlane.f32.xlu0 %v999
    %v1001 = vpop.xlane.xlu0 %1000
    %v1002 = vpack.c.bf16 %v998, %v998
    %1003 = vrot.lane.b32.xlu0 %v368, 48
    %v1004 = vpop.permute.xlu0 %1003
    %v1006 = vsel %vm195, %v1002, 0
    %v1009 = vsel %vm258, %v1004, 0
    %1011 = vmatprep.subr.bf16.mxu0 0
    %1012 = vmatpush1.bf16.msra.mxu0 %v1009
    %1013 = vmatprep.subr.bf16.mxu0 0
    %1014 = vmatpush1.bf16.msra.mxu0 0
    %1015 = vmatprep.subr.bf16.mxu0 0
    %1016 = vmatpush1.bf16.msra.mxu0 0
    %1017 = vmatprep.subr.bf16.mxu0 0
    %1018 = vmatpush1.bf16.msra.mxu0 0
    %1019 = vmatprep.subr.bf16.mxu0 0
    %1020 = vmatpush1.bf16.msra.mxu0 0
    %1021 = vmatprep.subr.bf16.mxu0 0
    %1022 = vmatpush1.bf16.msra.mxu0 0
    %1023 = vmatprep.subr.bf16.mxu0 0
    %1024 = vmatpush1.bf16.msra.mxu0 0
    %1025 = vmatprep.subr.bf16.mxu0 0
    %1026 = vmatpush1.bf16.msra.mxu0 0
    %1027 = vmatprep.subr.bf16.mxu0 0
    %1028 = vmatpush1.bf16.msra.mxu0 0
    %1029 = vmatprep.subr.bf16.mxu0 0
    %1030 = vmatpush1.bf16.msra.mxu0 0
    %1031 = vmatprep.subr.bf16.mxu0 0
    %1032 = vmatpush1.bf16.msra.mxu0 0
    %1033 = vmatprep.subr.bf16.mxu0 0
    %1034 = vmatpush1.bf16.msra.mxu0 0
    %1035 = vmatprep.subr.bf16.mxu0 0
    %1036 = vmatpush1.bf16.msra.mxu0 0
    %1037 = vmatprep.subr.bf16.mxu0 0
    %1038 = vmatpush1.bf16.msra.mxu0 0
    %1039 = vmatprep.subr.bf16.mxu0 0
    %1040 = vmatpush1.bf16.msra.mxu0 0
    %1041 = vmatprep.subr.bf16.mxu0 0
    %1042 = vmatpush1.bf16.msra.mxu0 0
    %1043 = vmatprep.mubr.bf16.mxu0 0
    %1044 = vmatmul.mubr.bf16.gmra.mrb[0].mxu0 %v1006
    %v1045 = vpop.f32.mrb[0].mxu0
    %v1046 = vadd.f32 0.0, %v1045
    %v1047 = vpop.f32.mrb[0].mxu0
    %v1048 = vpop.f32.mrb[0].mxu0
    %v1049 = vpop.f32.mrb[0].mxu0
    %1050 = vdwg.mxu0
    %v1051 = vrcp.pop %v1001
    %v1052 = vmul.f32 %v1046, %v1051
    %v1053 = vpack.c.bf16 %v1052, %v1052
    %v1055 = vrot.slane %v1053, 4
    %1056 = vrot.lane.b32.xlu0 %v1055, 16
    %v1057 = vpop.permute.xlu0 %1056
    %vm1059 = vcmask 195716
    %1060 = vst.msk [vmem:[#allocation2] sm:$0xf0] %vm1059, %v1057
    %1061 = vrot.lane.b32.xlu0 %v96, 24
    %v1062 = vpop.permute.xlu0 %1061
    %1063 = vrot.lane.b32.xlu0 %v97, 24
    %v1064 = vpop.permute.xlu0 %1063
    %v1067 = vmul.f32 %v90, %v1062
    %v1068 = vmul.f32 %v93, %v1064
    %1069 = vrot.lane.b32.xlu0 %v90, 104
    %v1070 = vpop.permute.xlu0 %1069
    %1071 = vrot.lane.b32.xlu0 %v93, 104
    %v1072 = vpop.permute.xlu0 %1071
    %1075 = vrot.lane.b32.xlu0 %v1070, 8
    %v1076 = vpop.permute.xlu0 %1075
    %v1077 = vsel %vm106, %v1076, %v1070
    %1078 = vrot.lane.b32.xlu0 %v1072, 8
    %v1079 = vpop.permute.xlu0 %1078
    %v1080 = vsel %vm106, %v1079, %v1072
    %1081 = vrot.lane.b32.xlu0 %v1077, 8
    %v1082 = vpop.permute.xlu0 %1081
    %1083 = vrot.lane.b32.xlu0 %v1080, 8
    %v1084 = vpop.permute.xlu0 %1083
    %v1085 = vsel %vm106, %v1082, %v1070
    %v1086 = vsel %vm106, %v1084, %v1072
    %v1087 = vmul.f32 %v1085, %v122
    %v1088 = vmul.f32 %v1086, %v124
    %1091 = vrot.lane.b32.xlu0 %v1087, 20
    %v1092 = vpop.permute.xlu0 %1091
    %1093 = vrot.lane.b32.xlu0 %v1088, 20
    %v1094 = vpop.permute.xlu0 %1093
    %v1097 = vadd.f32 %v1067, %v1092
    %v1098 = vadd.f32 %v1068, %v1094
    %1099 = vrot.lane.b32.xlu0 %v100, 56
    %v1100 = vpop.permute.xlu0 %1099
    %1101 = vrot.lane.b32.xlu0 %v101, 56
    %v1102 = vpop.permute.xlu0 %1101
    %v1105 = vmul.f32 %v90, %v1100
    %v1106 = vmul.f32 %v93, %v1102
    %1107 = vrot.lane.b32.xlu0 %v90, 72
    %v1108 = vpop.permute.xlu0 %1107
    %1109 = vrot.lane.b32.xlu0 %v93, 72
    %v1110 = vpop.permute.xlu0 %1109
    %1113 = vrot.lane.b32.xlu0 %v1108, 8
    %v1114 = vpop.permute.xlu0 %1113
    %v1115 = vsel %vm106, %v1114, %v1108
    %1116 = vrot.lane.b32.xlu0 %v1110, 8
    %v1117 = vpop.permute.xlu0 %1116
    %v1118 = vsel %vm106, %v1117, %v1110
    %1119 = vrot.lane.b32.xlu0 %v1115, 8
    %v1120 = vpop.permute.xlu0 %1119
    %1121 = vrot.lane.b32.xlu0 %v1118, 8
    %v1122 = vpop.permute.xlu0 %1121
    %v1123 = vsel %vm106, %v1120, %v1108
    %v1124 = vsel %vm106, %v1122, %v1110
    %v1125 = vmul.f32 %v1123, %v172
    %v1126 = vmul.f32 %v1124, %v174
    %1129 = vrot.lane.b32.xlu0 %v1125, 52
    %v1130 = vpop.permute.xlu0 %1129
    %1131 = vrot.lane.b32.xlu0 %v1126, 52
    %v1132 = vpop.permute.xlu0 %1131
    %v1135 = vadd.f32 %v1105, %v1130
    %v1136 = vadd.f32 %v1106, %v1132
    %v1137 = vpack.c.bf16 %v1098, %v1097
    %v1138 = vpack.c.bf16 %v1136, %v1135
    %1140 = vrot.lane.b32.xlu0 %v1137, 104
    %v1141 = vpop.permute.xlu0 %1140
    %1143 = vrot.lane.b32.xlu0 %v1138, 72
    %v1144 = vpop.permute.xlu0 %1143
    %v1146 = vsel %vm195, %v1141, 0
    %v1149 = vsel %vm195, %v1144, 0
    %1151 = vmatprep.subr.bf16.mxu0 0
    %1152 = vmatpush1.bf16.xpose.msra.mxu0 %v1149
    %1153 = vmatprep.subr.bf16.mxu0 0
    %1154 = vmatpush1.bf16.xpose.msra.mxu0 0
    %1155 = vmatprep.subr.bf16.mxu0 0
    %1156 = vmatpush1.bf16.xpose.msra.mxu0 0
    %1157 = vmatprep.subr.bf16.mxu0 0
    %1158 = vmatpush1.bf16.xpose.msra.mxu0 0
    %1159 = vmatprep.subr.bf16.mxu0 0
    %1160 = vmatpush1.bf16.xpose.msra.mxu0 0
    %1161 = vmatprep.subr.bf16.mxu0 0
    %1162 = vmatpush1.bf16.xpose.msra.mxu0 0
    %1163 = vmatprep.subr.bf16.mxu0 0
    %1164 = vmatpush1.bf16.xpose.msra.mxu0 0
    %1165 = vmatprep.subr.bf16.mxu0 0
    %1166 = vmatpush1.bf16.xpose.msra.mxu0 0
    %1167 = vmatprep.subr.bf16.mxu0 0
    %1168 = vmatpush1.bf16.xpose.msra.mxu0 0
    %1169 = vmatprep.subr.bf16.mxu0 0
    %1170 = vmatpush1.bf16.xpose.msra.mxu0 0
    %1171 = vmatprep.subr.bf16.mxu0 0
    %1172 = vmatpush1.bf16.xpose.msra.mxu0 0
    %1173 = vmatprep.subr.bf16.mxu0 0
    %1174 = vmatpush1.bf16.xpose.msra.mxu0 0
    %1175 = vmatprep.subr.bf16.mxu0 0
    %1176 = vmatpush1.bf16.xpose.msra.mxu0 0
    %1177 = vmatprep.subr.bf16.mxu0 0
    %1178 = vmatpush1.bf16.xpose.msra.mxu0 0
    %1179 = vmatprep.subr.bf16.mxu0 0
    %1180 = vmatpush1.bf16.xpose.msra.mxu0 0
    %1181 = vmatprep.subr.bf16.mxu0 0
    %1182 = vmatpush1.bf16.xpose.msra.mxu0 0
    %1183 = vmatprep.mubr.bf16.mxu0 0
    %1184 = vmatmul.mubr.bf16.gmra.mrb[0].mxu0 %v1146
    %v1185 = vpop.f32.mrb[0].mxu0
    %v1186 = vadd.f32 0.0, %v1185
    %v1187 = vpop.f32.mrb[0].mxu0
    %v1188 = vpop.f32.mrb[0].mxu0
    %v1189 = vpop.f32.mrb[0].mxu0
    %1190 = vdwg.mxu0
    %v1191 = vsel %vm195, %v1186, -inf
    %1192 = vmax.xlane.f32.xlu0 %v1191
    %v1193 = vpop.xlane.xlu0 %1192
    %v1194 = vsub.f32 %v1186, %v1193
    %v1195 = vmul.f32 %v1194, 1.442695
    %v1196 = vpow.pop %v1195
    %v1197 = vsel %vm195, %v1196, 0.0
    %1198 = vadd.xlane.f32.xlu0 %v1197
    %v1199 = vpop.xlane.xlu0 %1198
    %v1200 = vpack.c.bf16 %v1196, %v1196
    %1201 = vrot.lane.b32.xlu0 %v191, 40
    %v1202 = vpop.permute.xlu0 %1201
    %v1204 = vsel %vm195, %v1200, 0
    %v1207 = vsel %vm258, %v1202, 0
    %1209 = vmatprep.subr.bf16.mxu0 0
    %1210 = vmatpush1.bf16.msra.mxu0 %v1207
    %1211 = vmatprep.subr.bf16.mxu0 0
    %1212 = vmatpush1.bf16.msra.mxu0 0
    %1213 = vmatprep.subr.bf16.mxu0 0
    %1214 = vmatpush1.bf16.msra.mxu0 0
    %1215 = vmatprep.subr.bf16.mxu0 0
    %1216 = vmatpush1.bf16.msra.mxu0 0
    %1217 = vmatprep.subr.bf16.mxu0 0
    %1218 = vmatpush1.bf16.msra.mxu0 0
    %1219 = vmatprep.subr.bf16.mxu0 0
    %1220 = vmatpush1.bf16.msra.mxu0 0
    %1221 = vmatprep.subr.bf16.mxu0 0
    %1222 = vmatpush1.bf16.msra.mxu0 0
    %1223 = vmatprep.subr.bf16.mxu0 0
    %1224 = vmatpush1.bf16.msra.mxu0 0
    %1225 = vmatprep.subr.bf16.mxu0 0
    %1226 = vmatpush1.bf16.msra.mxu0 0
    %1227 = vmatprep.subr.bf16.mxu0 0
    %1228 = vmatpush1.bf16.msra.mxu0 0
    %1229 = vmatprep.subr.bf16.mxu0 0
    %1230 = vmatpush1.bf16.msra.mxu0 0
    %1231 = vmatprep.subr.bf16.mxu0 0
    %1232 = vmatpush1.bf16.msra.mxu0 0
    %1233 = vmatprep.subr.bf16.mxu0 0
    %1234 = vmatpush1.bf16.msra.mxu0 0
    %1235 = vmatprep.subr.bf16.mxu0 0
    %1236 = vmatpush1.bf16.msra.mxu0 0
    %1237 = vmatprep.subr.bf16.mxu0 0
    %1238 = vmatpush1.bf16.msra.mxu0 0
    %1239 = vmatprep.subr.bf16.mxu0 0
    %1240 = vmatpush1.bf16.msra.mxu0 0
    %1241 = vmatprep.mubr.bf16.mxu0 0
    %1242 = vmatmul.mubr.bf16.gmra.mrb[0].mxu0 %v1204
    %v1243 = vpop.f32.mrb[0].mxu0
    %v1244 = vadd.f32 0.0, %v1243
    %v1245 = vpop.f32.mrb[0].mxu0
    %v1246 = vpop.f32.mrb[0].mxu0
    %v1247 = vpop.f32.mrb[0].mxu0
    %1248 = vdwg.mxu0
    %v1249 = vrcp.pop %v1199
    %v1250 = vmul.f32 %v1244, %v1249
    %v1251 = vpack.c.bf16 %v1250, %v1250
    %1253 = vrot.lane.b32.xlu0 %v1251, 24
    %v1254 = vpop.permute.xlu0 %1253
    %vm1256 = vcmask 257216
    %1257 = vst.msk [vmem:[#allocation2] sm:$0xf] %vm1256, %v1254
    %v1258 = vrot.slane %v1137, 4
    %1259 = vrot.lane.b32.xlu0 %v1258, 104
    %v1260 = vpop.permute.xlu0 %1259
    %v1261 = vrot.slane %v1138, 4
    %1262 = vrot.lane.b32.xlu0 %v1261, 72
    %v1263 = vpop.permute.xlu0 %1262
    %v1265 = vsel %vm195, %v1260, 0
    %v1268 = vsel %vm195, %v1263, 0
    %1270 = vmatprep.subr.bf16.mxu0 0
    %1271 = vmatpush1.bf16.xpose.msra.mxu0 %v1268
    %1272 = vmatprep.subr.bf16.mxu0 0
    %1273 = vmatpush1.bf16.xpose.msra.mxu0 0
    %1274 = vmatprep.subr.bf16.mxu0 0
    %1275 = vmatpush1.bf16.xpose.msra.mxu0 0
    %1276 = vmatprep.subr.bf16.mxu0 0
    %1277 = vmatpush1.bf16.xpose.msra.mxu0 0
    %1278 = vmatprep.subr.bf16.mxu0 0
    %1279 = vmatpush1.bf16.xpose.msra.mxu0 0
    %1280 = vmatprep.subr.bf16.mxu0 0
    %1281 = vmatpush1.bf16.xpose.msra.mxu0 0
    %1282 = vmatprep.subr.bf16.mxu0 0
    %1283 = vmatpush1.bf16.xpose.msra.mxu0 0
    %1284 = vmatprep.subr.bf16.mxu0 0
    %1285 = vmatpush1.bf16.xpose.msra.mxu0 0
    %1286 = vmatprep.subr.bf16.mxu0 0
    %1287 = vmatpush1.bf16.xpose.msra.mxu0 0
    %1288 = vmatprep.subr.bf16.mxu0 0
    %1289 = vmatpush1.bf16.xpose.msra.mxu0 0
    %1290 = vmatprep.subr.bf16.mxu0 0
    %1291 = vmatpush1.bf16.xpose.msra.mxu0 0
    %1292 = vmatprep.subr.bf16.mxu0 0
    %1293 = vmatpush1.bf16.xpose.msra.mxu0 0
    %1294 = vmatprep.subr.bf16.mxu0 0
    %1295 = vmatpush1.bf16.xpose.msra.mxu0 0
    %1296 = vmatprep.subr.bf16.mxu0 0
    %1297 = vmatpush1.bf16.xpose.msra.mxu0 0
    %1298 = vmatprep.subr.bf16.mxu0 0
    %1299 = vmatpush1.bf16.xpose.msra.mxu0 0
    %1300 = vmatprep.subr.bf16.mxu0 0
    %1301 = vmatpush1.bf16.xpose.msra.mxu0 0
    %1302 = vmatprep.mubr.bf16.mxu0 0
    %1303 = vmatmul.mubr.bf16.gmra.mrb[0].mxu0 %v1265
    %v1304 = vpop.f32.mrb[0].mxu0
    %v1305 = vadd.f32 0.0, %v1304
    %v1306 = vpop.f32.mrb[0].mxu0
    %v1307 = vpop.f32.mrb[0].mxu0
    %v1308 = vpop.f32.mrb[0].mxu0
    %1309 = vdwg.mxu0
    %v1310 = vsel %vm195, %v1305, -inf
    %1311 = vmax.xlane.f32.xlu0 %v1310
    %v1312 = vpop.xlane.xlu0 %1311
    %v1313 = vsub.f32 %v1305, %v1312
    %v1314 = vmul.f32 %v1313, 1.442695
    %v1315 = vpow.pop %v1314
    %v1316 = vsel %vm195, %v1315, 0.0
    %1317 = vadd.xlane.f32.xlu0 %v1316
    %v1318 = vpop.xlane.xlu0 %1317
    %v1319 = vpack.c.bf16 %v1315, %v1315
    %1320 = vrot.lane.b32.xlu0 %v368, 40
    %v1321 = vpop.permute.xlu0 %1320
    %v1323 = vsel %vm195, %v1319, 0
    %v1326 = vsel %vm258, %v1321, 0
    %1328 = vmatprep.subr.bf16.mxu0 0
    %1329 = vmatpush1.bf16.msra.mxu0 %v1326
    %1330 = vmatprep.subr.bf16.mxu0 0
    %1331 = vmatpush1.bf16.msra.mxu0 0
    %1332 = vmatprep.subr.bf16.mxu0 0
    %1333 = vmatpush1.bf16.msra.mxu0 0
    %1334 = vmatprep.subr.bf16.mxu0 0
    %1335 = vmatpush1.bf16.msra.mxu0 0
    %1336 = vmatprep.subr.bf16.mxu0 0
    %1337 = vmatpush1.bf16.msra.mxu0 0
    %1338 = vmatprep.subr.bf16.mxu0 0
    %1339 = vmatpush1.bf16.msra.mxu0 0
    %1340 = vmatprep.subr.bf16.mxu0 0
    %1341 = vmatpush1.bf16.msra.mxu0 0
    %1342 = vmatprep.subr.bf16.mxu0 0
    %1343 = vmatpush1.bf16.msra.mxu0 0
    %1344 = vmatprep.subr.bf16.mxu0 0
    %1345 = vmatpush1.bf16.msra.mxu0 0
    %1346 = vmatprep.subr.bf16.mxu0 0
    %1347 = vmatpush1.bf16.msra.mxu0 0
    %1348 = vmatprep.subr.bf16.mxu0 0
    %1349 = vmatpush1.bf16.msra.mxu0 0
    %1350 = vmatprep.subr.bf16.mxu0 0
    %1351 = vmatpush1.bf16.msra.mxu0 0
    %1352 = vmatprep.subr.bf16.mxu0 0
    %1353 = vmatpush1.bf16.msra.mxu0 0
    %1354 = vmatprep.subr.bf16.mxu0 0
    %1355 = vmatpush1.bf16.msra.mxu0 0
    %1356 = vmatprep.subr.bf16.mxu0 0
    %1357 = vmatpush1.bf16.msra.mxu0 0
    %1358 = vmatprep.subr.bf16.mxu0 0
    %1359 = vmatpush1.bf16.msra.mxu0 0
    %1360 = vmatprep.mubr.bf16.mxu0 0
    %1361 = vmatmul.mubr.bf16.gmra.mrb[0].mxu0 %v1323
    %v1362 = vpop.f32.mrb[0].mxu0
    %v1363 = vadd.f32 0.0, %v1362
    %v1364 = vpop.f32.mrb[0].mxu0
    %v1365 = vpop.f32.mrb[0].mxu0
    %v1366 = vpop.f32.mrb[0].mxu0
    %1367 = vdwg.mxu0
    %v1368 = vrcp.pop %v1318
    %v1369 = vmul.f32 %v1363, %v1368
    %v1370 = vpack.c.bf16 %v1369, %v1369
    %v1372 = vrot.slane %v1370, 4
    %1373 = vrot.lane.b32.xlu0 %v1372, 24
    %v1374 = vpop.permute.xlu0 %1373
    %vm1376 = vcmask 261316
    %1377 = vst.msk [vmem:[#allocation2] sm:$0xf0] %vm1376, %v1374
    %p1378 = scmp.eq.s32.totalorder 0, 0
    // Predicated region
    $region30: #{tpu_custom_call.1} parent=1 // pred_check
      %p1379 = pneg %p1378
    $region31: #{tpu_custom_call.1} parent=1 // pred_check_branch
      %1381 = sbr.rel (%p1379) target = $region33
    $region32: #{tpu_custom_call.1} parent=1 // pred_region
      %v1382 = vld [vmem:[#allocation2] sm:$0xff]
      %v1383 = vld [vmem:[%s2] sm:$0xf]
      %v1384 = vld [vmem:[%s2 + $0x4] sm:$0xf]
      %v1385 = vld [vmem:[%s2 + $0x8] sm:$0xf]
      %v1386 = vld [vmem:[%s2 + $0xc] sm:$0xf]
      %v1391 = vunpack.c.l.b16 %v1383
      %v1392 = vunpack.c.l.b16 %v1384
      %v1393 = vunpack.c.l.b16 %v1385
      %v1394 = vunpack.c.l.b16 %v1386
      %v1395 = vpack.c.b16 %v1392, %v1391
      %v1396 = vpack.c.b16 %v1394, %v1393
      %v1400 = vsel %vm51, %v1382, 0
      %1402 = vmatprep.subr.bf16.mxu0 0
      %1403 = vmatpush1.bf16.msra.mxu0 %v1395
      %1404 = vmatprep.subr.bf16.mxu0 0
      %1405 = vmatpush1.bf16.msra.mxu0 %v1396
      %1406 = vmatprep.subr.bf16.mxu0 0
      %1407 = vmatpush1.bf16.msra.mxu0 0
      %1408 = vmatprep.subr.bf16.mxu0 0
      %1409 = vmatpush1.bf16.msra.mxu0 0
      %1410 = vmatprep.subr.bf16.mxu0 0
      %1411 = vmatpush1.bf16.msra.mxu0 0
      %1412 = vmatprep.subr.bf16.mxu0 0
      %1413 = vmatpush1.bf16.msra.mxu0 0
      %1414 = vmatprep.subr.bf16.mxu0 0
      %1415 = vmatpush1.bf16.msra.mxu0 0
      %1416 = vmatprep.subr.bf16.mxu0 0
      %1417 = vmatpush1.bf16.msra.mxu0 0
      %1418 = vmatprep.subr.bf16.mxu0 0
      %1419 = vmatpush1.bf16.msra.mxu0 0
      %1420 = vmatprep.subr.bf16.mxu0 0
      %1421 = vmatpush1.bf16.msra.mxu0 0
      %1422 = vmatprep.subr.bf16.mxu0 0
      %1423 = vmatpush1.bf16.msra.mxu0 0
      %1424 = vmatprep.subr.bf16.mxu0 0
      %1425 = vmatpush1.bf16.msra.mxu0 0
      %1426 = vmatprep.subr.bf16.mxu0 0
      %1427 = vmatpush1.bf16.msra.mxu0 0
      %1428 = vmatprep.subr.bf16.mxu0 0
      %1429 = vmatpush1.bf16.msra.mxu0 0
      %1430 = vmatprep.subr.bf16.mxu0 0
      %1431 = vmatpush1.bf16.msra.mxu0 0
      %1432 = vmatprep.subr.bf16.mxu0 0
      %1433 = vmatpush1.bf16.msra.mxu0 0
      %1434 = vmatprep.mubr.bf16.mxu0 0
      %1435 = vmatmul.mubr.bf16.gmra.mrb[0].mxu0 %v1400
      %v1436 = vpop.f32.mrb[0].mxu0
      %v1437 = vadd.f32 0.0, %v1436
      %v1438 = vpop.f32.mrb[0].mxu0
      %v1439 = vpop.f32.mrb[0].mxu0
      %v1440 = vadd.f32 0.0, %v1439
      %v1441 = vpop.f32.mrb[0].mxu0
      %1442 = vdwg.mxu0
      %v1443 = vpack.c.bf16 %v1440, %v1437
      %v1445 = vunpack.c.l.b16 %v1443
      %v1446 = vunpack.c.h.b16 %v1443
      %v1447 = vpack.c.b16 %v1445, %v1445
      %v1448 = vpack.c.b16 %v1446, %v1446
      %vm1451 = vcmask 257024
      %1452 = vst.msk [vmem:[#allocation3] sm:$0xf] %vm1451, %v1447
      %1453 = vst.msk [vmem:[#allocation3 + $0x4] sm:$0xf] %vm1451, %v1448
    $region33: #{tpu_custom_call.1} parent=1 // pred_fallthru
      _
    // Predicated region
    $region34: #{tpu_custom_call.1} parent=1 // pred_check
      _
    $region35: #{tpu_custom_call.1} parent=1 // pred_check_branch
      %1455 = sbr.rel (0) target = $region37
    $region36: #{tpu_custom_call.1} parent=1 // pred_region
      %s1457 = ssub.s32 128, 128
      %1458 = vsyncadd [#allocation4], %s1457
      %s1459 = sshll.u32 [#allocation3], 4
      %s1460 = int_to_ptr.vmem [resolvable:$true] %s1459
      %1465 = dma.vmem_to_hbm [thread:$0]  %s1460, 128, %s7, [#allocation4], 64, 64, 4
    $region37: #{tpu_custom_call.1} parent=1 // pred_fallthru
      _
    // Predicated region
    $region38: #{tpu_custom_call.1} parent=1 // pred_check
      _
    $region39: #{tpu_custom_call.1} parent=1 // pred_check_branch
      %1467 = sbr.rel (0) target = $region41
    $region40: #{tpu_custom_call.1} parent=1 // pred_region
      %1468 = dma.done [#allocation4], 128
    $region41: #{tpu_custom_call.1} parent=1 // pred_fallthru
      _
    %1469 = vsyncpa [#allocation4], 1

</llo_original>
